<compile_context>
chip_gen: v6e
topology: v6e:2x2x1
jax: 0.10.0
libtpu: 0.0.40
codegen_flags: <defaults>
</compile_context>

<pallas_src>
import functools

import jax
import jax.numpy as jnp
import numpy as np
from jax import lax
from jax.experimental import pallas as pl
from jax.experimental.pallas import tpu as pltpu


_TAPS = tuple((dh, dw) for dh in (-1, 0, 1) for dw in (-1, 0, 1))


# -----------------------------------------------------------------------------
# Pallas kernel: one MBConv block, a (B_TILE, C, HW) batch tile per grid step.
# -----------------------------------------------------------------------------
def mbconv_kernel(x_ref, params_ref, mask9_ref, o_ref, *, sq, H, W, apply_residual):
    B, Cin, HW = x_ref.shape
    OUP = params_ref.shape[0]
    FO = o_ref.shape[1]

    p = params_ref[...]          # (OUP, 31)  -- one packed constant operand
    masks = mask9_ref[...]       # (9, HW)    -- depthwise SAME-padding edge masks

    # ---- static unpack of the packed constants (BN scales already folded) -------
    c = 0
    w_exp = p[:, c:c + Cin]; c += Cin            # (OUP, Cin)  expand 1x1 * BN0 scale
    bn0_b = p[:, c:c + 1]; c += 1                # (OUP, 1)
    w_dw9 = p[:, c:c + 9]; c += 9                # (OUP, 9)    depthwise * BN1 scale
    bn1_b = p[:, c:c + 1]; c += 1                # (OUP, 1)
    w_ser = p[:, c:c + sq]; c += sq              # (OUP, SQ)   SE reduce (transposed)
    b_ser = p[0:1, c:c + sq]; c += sq            # (1, SQ)
    w_see = p[:, c:c + sq]; c += sq              # (OUP, SQ)   SE expand
    b_see = p[:, c:c + 1]; c += 1                # (OUP, 1)
    w_proj = p[0:FO, c:c + OUP]; c += OUP        # (FO, OUP)   project 1x1 * BN2 scale
    bn2_b = p[0:FO, c:c + 1]                     # (FO, 1)

    # ---- unrolled loop over the batch tile (amortizes grid-step/DMA overhead) ----
    for b in range(B):
        x_in = x_ref[b].astype(jnp.float32)      # (Cin, HW) lane-dense tile

        # expand 1x1 conv (BN0 folded) + swish -- VPU broadcast-MAC (Cin is tiny;
        # an MXU matmul with K=4 would waste the array and pay push/pop latency).
        x = jnp.zeros((OUP, HW), jnp.float32)
        for ci in range(Cin):
            x = x + w_exp[:, ci:ci + 1] * x_in[ci:ci + 1, :]
        x = x + bn0_b
        x = x * jax.nn.sigmoid(x)

        # depthwise 3x3, stride 1, SAME zero padding: 9 circular lane rolls (XLU)
        # with precomputed validity masks + per-channel MACs.
        acc = jnp.zeros((OUP, HW), jnp.float32)
        for t, (dh, dw) in enumerate(_TAPS):
            d = dh * W + dw
            if d == 0:
                shifted = x
            else:
                shifted = pltpu.roll(x, (-d) % HW, axis=1) * masks[t:t + 1, :]
            acc = acc + shifted * w_dw9[:, t:t + 1]
        x = acc + bn1_b
        x = x * jax.nn.sigmoid(x)

        # squeeze & excite (VPU/XLU only, no 1-row MXU trips) -> per-channel gate
        pooled = jnp.mean(x, axis=1, keepdims=True)                          # (OUP, 1)
        s = jnp.sum(w_ser * pooled, axis=0, keepdims=True) + b_ser           # (1, SQ)
        s = s * jax.nn.sigmoid(s)
        e = jnp.sum(w_see * s, axis=1, keepdims=True) + b_see                # (OUP, 1)
        gate = jax.nn.sigmoid(e)                                             # (OUP, 1)

        # project 1x1 conv (BN2 folded) with the SE gate folded into the per-column
        # projection coefficients (saves a full (OUP, HW) VPU multiply); VPU MAC
        # unrolled over OUP for this tiny channel config.
        y = jnp.zeros((FO, HW), jnp.float32)
        for o in range(OUP):
            coef = w_proj[:, o:o + 1] * gate[o:o + 1, :]                     # (FO, 1)
            y = y + coef * x[o:o + 1, :]
        y = y + bn2_b

        # identity skip (id_skip, stride==1, input_filters==output_filters)
        if apply_residual:
            y = y + x_in
        o_ref[b] = y.astype(o_ref.dtype)                                     # lane-dense store


def mbconv_pallas(x_flat, packed, mask9, *, sq, fo, H, W, apply_residual, b_tile):
    N, Cin, HW = x_flat.shape
    OUP = packed.shape[0]
    assert N % b_tile == 0
    grid = (N // b_tile,)

    def full(arr):
        return pl.BlockSpec(arr.shape, lambda n, nd=arr.ndim: (0,) * nd)

    # Advisory cost estimate so XLA schedules this call sensibly inside a full net.
    flops = int(N * HW * 2 * (OUP * Cin + 9 * OUP + fo * OUP) + N * 4 * OUP * sq)
    transcendentals = int(N * (2 * OUP * HW + OUP + sq))
    bytes_accessed = int(4 * (x_flat.size + N * fo * HW + packed.size + mask9.size))
    ce = pl.CostEstimate(flops=flops, transcendentals=transcendentals,
                         bytes_accessed=bytes_accessed)

    kernel = functools.partial(mbconv_kernel, sq=sq, H=H, W=W,
                               apply_residual=apply_residual)

    return pl.pallas_call(
        kernel,
        out_shape=jax.ShapeDtypeStruct((N, fo, HW), jnp.float32),
        grid_spec=pltpu.PrefetchScalarGridSpec(
            num_scalar_prefetch=0,
            grid=grid,
            in_specs=[
                pl.BlockSpec((b_tile, Cin, HW), lambda n: (n, 0, 0)),  # batch tile
                full(packed),                                          # packed constants
                full(mask9),                                           # dw edge masks
            ],
            out_specs=pl.BlockSpec((b_tile, fo, HW), lambda n: (n, 0, 0)),
        ),
        compiler_params=pltpu.CompilerParams(
            dimension_semantics=("parallel",)),   # v7x: batch tiles across TensorCores
        cost_estimate=ce,
    )(x_flat, packed, mask9)


def make_dw_masks(H, W):
    """(9, H*W) f32 validity masks for the 3x3 SAME-padded depthwise taps."""
    hh, ww = np.meshgrid(np.arange(H), np.arange(W), indexing='ij')
    h = hh.reshape(-1)
    w = ww.reshape(-1)
    rows = []
    for dh in (-1, 0, 1):
        for dw in (-1, 0, 1):
            valid = (h + dh >= 0) & (h + dh < H) & (w + dw >= 0) & (w + dw < W)
            rows.append(valid.astype(np.float32))
    return jnp.asarray(np.stack(rows, axis=0))


# -----------------------------------------------------------------------------
# Parameter construction (torch-style OIHW) + BN-folded, packed kernel layout
# -----------------------------------------------------------------------------
def init_params(key, c_in, expand_ratio, k, se_ratio, c_out, eps):
    oup = c_in * expand_ratio
    sq = max(1, int(oup * se_ratio))
    ks = jax.random.split(key, 10)

    def conv_w(k_, shape, fan_in):
        return jax.random.normal(k_, shape, jnp.float32) / jnp.sqrt(float(fan_in))

    def bn(k_, c):
        k1, k2, k3, k4 = jax.random.split(k_, 4)
        gamma = jax.random.uniform(k1, (c,), minval=0.5, maxval=1.5)
        beta = jax.random.normal(k2, (c,)) * 0.1
        mean = jax.random.normal(k3, (c,)) * 0.1
        var = jax.random.uniform(k4, (c,), minval=0.5, maxval=1.5)
        return gamma, beta, mean, var

    return {
        'eps': eps,
        'w_expand': conv_w(ks[0], (oup, c_in, 1, 1), c_in),
        'w_dw': conv_w(ks[1], (oup, 1, k, k), k * k),
        'w_ser': conv_w(ks[2], (sq, oup, 1, 1), oup),
        'b_ser': jax.random.normal(ks[3], (sq,)) * 0.1,
        'w_see': conv_w(ks[4], (oup, sq, 1, 1), sq),
        'b_see': jax.random.normal(ks[5], (oup,)) * 0.1,
        'w_proj': conv_w(ks[6], (c_out, oup, 1, 1), oup),
        'bn0': bn(ks[7], oup),
        'bn1': bn(ks[8], oup),
        'bn2': bn(ks[9], c_out),
    }


def kernel_params(P):
    """Fold eval-mode BN scales into the conv weights and pack every small constant
    into ONE (OUP, 31) operand (column layout mirrored by the in-kernel unpack)."""
    eps = P['eps']

    def fold(bn):
        g, b, m, v = bn
        s = g / jnp.sqrt(v + eps)
        return s, b - m * s

    s0, b0 = fold(P['bn0'])
    s1, b1 = fold(P['bn1'])
    s2, b2 = fold(P['bn2'])

    oup = P['w_dw'].shape[0]
    cin = P['w_expand'].shape[1]
    sq = P['w_ser'].shape[0]
    fo = P['w_proj'].shape[0]

    w_exp = P['w_expand'][:, :, 0, 0] * s0[:, None]                 # (OUP, Cin)
    bn0_b = b0[:, None]                                             # (OUP, 1)
    w_dw9 = P['w_dw'][:, 0].reshape(oup, 9) * s1[:, None]           # (OUP, 9)
    bn1_b = b1[:, None]                                             # (OUP, 1)
    w_ser = P['w_ser'][:, :, 0, 0].T                                # (OUP, SQ)
    b_ser = jnp.broadcast_to(P['b_ser'][None, :], (oup, sq))        # row 0 used
    w_see = P['w_see'][:, :, 0, 0]                                  # (OUP, SQ)
    b_see = P['b_see'][:, None]                                     # (OUP, 1)
    w_proj = P['w_proj'][:, :, 0, 0] * s2[:, None]                  # (FO, OUP)
    w_proj_pad = jnp.zeros((oup, oup), jnp.float32).at[:fo, :].set(w_proj)
    bn2_b_pad = jnp.zeros((oup, 1), jnp.float32).at[:fo, 0].set(b2)

    packed = jnp.concatenate(
        [w_exp, bn0_b, w_dw9, bn1_b, w_ser, b_ser, w_see, b_see, w_proj_pad, bn2_b_pad],
        axis=1).astype(jnp.float32)
    meta = dict(cin=cin, oup=oup, sq=sq, fo=fo)
    return packed, meta


@functools.partial(jax.jit, static_argnames=('sq', 'fo', 'H', 'W'))
def mbconv_forward(x_nchw, packed, mask9, *, sq, fo, H, W):
    N, C, _, _ = x_nchw.shape
    apply_residual = (C == fo)            # stride==1 (id_skip path) in this kernel
    # >= 2 grid steps when possible so both v7x TensorCores get a batch tile;
    # otherwise take the whole batch in one step (v5e/v6e amortization).
    b_tile = (N // 2) if (N >= 2 and N % 2 == 0) else N
    x_flat = x_nchw.reshape(N, C, H * W)  # free merge, stays in NCHW order
    y = mbconv_pallas(x_flat, packed, mask9, sq=sq, fo=fo, H=H, W=W,
                      apply_residual=apply_residual, b_tile=b_tile)
    return y.reshape(N, fo, H, W)


# -----------------------------------------------------------------------------
# Pure-JAX reference (NCHW, mirrors the PyTorch forward in eval mode)
# -----------------------------------------------------------------------------
def ref_forward(x, P):
    eps = P['eps']
    dn = ('NCHW', 'OIHW', 'NCHW')

    def bn(h, stats):
        g, b, m, v = stats
        return ((h - m[None, :, None, None]) / jnp.sqrt(v[None, :, None, None] + eps)
                * g[None, :, None, None] + b[None, :, None, None])

    def swish(h):
        return h * jax.nn.sigmoid(h)

    oup = P['w_dw'].shape[0]
    h = lax.conv_general_dilated(x, P['w_expand'], (1, 1), 'VALID', dimension_numbers=dn)
    h = swish(bn(h, P['bn0']))
    h = lax.conv_general_dilated(h, P['w_dw'], (1, 1), [(1, 1), (1, 1)],
                                 feature_group_count=oup, dimension_numbers=dn)
    h = swish(bn(h, P['bn1']))
    s = jnp.mean(h, axis=(2, 3), keepdims=True)
    s = lax.conv_general_dilated(s, P['w_ser'], (1, 1), 'VALID', dimension_numbers=dn)
    s = s + P['b_ser'][None, :, None, None]
    s = swish(s)
    s = lax.conv_general_dilated(s, P['w_see'], (1, 1), 'VALID', dimension_numbers=dn)
    s = s + P['b_see'][None, :, None, None]
    h = jax.nn.sigmoid(s) * h
    h = lax.conv_general_dilated(h, P['w_proj'], (1, 1), 'VALID', dimension_numbers=dn)
    h = bn(h, P['bn2'])
    if P['w_expand'].shape[1] == P['w_proj'].shape[0]:  # id_skip valid for this config
        h = h + x
    return h


# -----------------------------------------------------------------------------
if __name__ == "__main__":
    N, C_IN, H, W = 4, 4, 16, 16
    EXPAND, K, SE_RATIO, C_OUT = 2, 3, 0.25, 4
    BN_EPS = 1e-3

    key = jax.random.PRNGKey(0)
    k_par, k_x = jax.random.split(key)
    P = init_params(k_par, C_IN, EXPAND, K, SE_RATIO, C_OUT, BN_EPS)
    packed, meta = kernel_params(P)
    mask9 = make_dw_masks(H, W)

    x = jax.random.normal(k_x, (N, C_IN, H, W), jnp.float32)

    y = mbconv_forward(x, packed, mask9, sq=meta['sq'], fo=meta['fo'], H=H, W=W)
    y = jax.block_until_ready(y)

    y_ref = ref_forward(x, P)
    np.testing.assert_allclose(np.asarray(y), np.asarray(y_ref), rtol=1e-3, atol=1e-3)

    print("KERNEL_OK")
</pallas_src>

<mosaic_0001>
module attributes {stable_mosaic.version = 11 : i64} {
  func.func @mbconv_kernel(%arg0: i32, %arg1: memref<2x4x256xf32, #tpu.memory_space<vmem>>, %arg2: memref<8x31xf32, #tpu.memory_space<vmem>>, %arg3: memref<9x256xf32, #tpu.memory_space<vmem>>, %arg4: memref<2x4x256xf32, #tpu.memory_space<vmem>>) attributes {dimension_semantics = [#tpu.dimension_semantics<parallel>], iteration_bounds = array<i64: 2>, scalar_prefetch = 0 : i64, scratch_operands = 0 : i64, tpu.core_type = #tpu.core_type<tc>, window_params = [{transform_indices = @transform_0, window_bounds = array<i64: 2, 4, 256>}, {pipeline_mode = #tpu.pipeline_mode<synchronous>, transform_indices = @transform_1, window_bounds = array<i64: 8, 31>}, {pipeline_mode = #tpu.pipeline_mode<synchronous>, transform_indices = @transform_2, window_bounds = array<i64: 9, 256>}, {transform_indices = @transform_3, window_bounds = array<i64: 2, 4, 256>}]} {
    %c0 = arith.constant 0 : index
    %c0_0 = arith.constant 0 : index
    %0 = vector.load %arg2[%c0, %c0_0] : memref<8x31xf32, #tpu.memory_space<vmem>>, vector<8x31xf32>
    %c0_1 = arith.constant 0 : index
    %c0_2 = arith.constant 0 : index
    %1 = vector.load %arg3[%c0_1, %c0_2] : memref<9x256xf32, #tpu.memory_space<vmem>>, vector<9x256xf32>
    %2 = vector.extract_strided_slice %0 {offsets = [0, 0], sizes = [8, 4], strides = [1, 1]} : vector<8x31xf32> to vector<8x4xf32>
    %3 = vector.extract_strided_slice %0 {offsets = [0, 4], sizes = [8, 1], strides = [1, 1]} : vector<8x31xf32> to vector<8x1xf32>
    %4 = vector.extract_strided_slice %0 {offsets = [0, 5], sizes = [8, 9], strides = [1, 1]} : vector<8x31xf32> to vector<8x9xf32>
    %5 = vector.extract_strided_slice %0 {offsets = [0, 14], sizes = [8, 1], strides = [1, 1]} : vector<8x31xf32> to vector<8x1xf32>
    %6 = vector.extract_strided_slice %0 {offsets = [0, 15], sizes = [8, 2], strides = [1, 1]} : vector<8x31xf32> to vector<8x2xf32>
    %7 = vector.extract_strided_slice %0 {offsets = [0, 17], sizes = [1, 2], strides = [1, 1]} : vector<8x31xf32> to vector<1x2xf32>
    %8 = vector.extract_strided_slice %0 {offsets = [0, 19], sizes = [8, 2], strides = [1, 1]} : vector<8x31xf32> to vector<8x2xf32>
    %9 = vector.extract_strided_slice %0 {offsets = [0, 21], sizes = [8, 1], strides = [1, 1]} : vector<8x31xf32> to vector<8x1xf32>
    %10 = vector.extract_strided_slice %0 {offsets = [0, 22], sizes = [4, 8], strides = [1, 1]} : vector<8x31xf32> to vector<4x8xf32>
    %11 = vector.extract_strided_slice %0 {offsets = [0, 30], sizes = [4, 1], strides = [1, 1]} : vector<8x31xf32> to vector<4x1xf32>
    %c0_3 = arith.constant 0 : index
    %c0_4 = arith.constant 0 : index
    %c0_5 = arith.constant 0 : index
    %12 = vector.load %arg1[%c0_3, %c0_4, %c0_5] : memref<2x4x256xf32, #tpu.memory_space<vmem>>, vector<1x4x256xf32>
    %13 = vector.shape_cast %12 : vector<1x4x256xf32> to vector<4x256xf32>
    %cst = arith.constant 0.000000e+00 : f32
    %14 = vector.broadcast %cst : f32 to vector<8x256xf32>
    %15 = vector.extract_strided_slice %2 {offsets = [0, 0], sizes = [8, 1], strides = [1, 1]} : vector<8x4xf32> to vector<8x1xf32>
    %16 = vector.extract_strided_slice %13 {offsets = [0, 0], sizes = [1, 256], strides = [1, 1]} : vector<4x256xf32> to vector<1x256xf32>
    %17 = vector.broadcast %15 : vector<8x1xf32> to vector<8x256xf32>
    %18 = vector.broadcast %16 : vector<1x256xf32> to vector<8x256xf32>
    %19 = arith.mulf %17, %18 : vector<8x256xf32>
    %20 = arith.addf %14, %19 : vector<8x256xf32>
    %21 = vector.extract_strided_slice %2 {offsets = [0, 1], sizes = [8, 1], strides = [1, 1]} : vector<8x4xf32> to vector<8x1xf32>
    %22 = vector.extract_strided_slice %13 {offsets = [1, 0], sizes = [1, 256], strides = [1, 1]} : vector<4x256xf32> to vector<1x256xf32>
    %23 = vector.broadcast %21 : vector<8x1xf32> to vector<8x256xf32>
    %24 = vector.broadcast %22 : vector<1x256xf32> to vector<8x256xf32>
    %25 = arith.mulf %23, %24 : vector<8x256xf32>
    %26 = arith.addf %20, %25 : vector<8x256xf32>
    %27 = vector.extract_strided_slice %2 {offsets = [0, 2], sizes = [8, 1], strides = [1, 1]} : vector<8x4xf32> to vector<8x1xf32>
    %28 = vector.extract_strided_slice %13 {offsets = [2, 0], sizes = [1, 256], strides = [1, 1]} : vector<4x256xf32> to vector<1x256xf32>
    %29 = vector.broadcast %27 : vector<8x1xf32> to vector<8x256xf32>
    %30 = vector.broadcast %28 : vector<1x256xf32> to vector<8x256xf32>
    %31 = arith.mulf %29, %30 : vector<8x256xf32>
    %32 = arith.addf %26, %31 : vector<8x256xf32>
    %33 = vector.extract_strided_slice %2 {offsets = [0, 3], sizes = [8, 1], strides = [1, 1]} : vector<8x4xf32> to vector<8x1xf32>
    %34 = vector.extract_strided_slice %13 {offsets = [3, 0], sizes = [1, 256], strides = [1, 1]} : vector<4x256xf32> to vector<1x256xf32>
    %35 = vector.broadcast %33 : vector<8x1xf32> to vector<8x256xf32>
    %36 = vector.broadcast %34 : vector<1x256xf32> to vector<8x256xf32>
    %37 = arith.mulf %35, %36 : vector<8x256xf32>
    %38 = arith.addf %32, %37 : vector<8x256xf32>
    %39 = vector.broadcast %3 : vector<8x1xf32> to vector<8x256xf32>
    %40 = arith.addf %38, %39 : vector<8x256xf32>
    %41 = arith.negf %40 : vector<8x256xf32>
    %42 = math.exp %41 : vector<8x256xf32>
    %cst_6 = arith.constant 1.000000e+00 : f32
    %43 = vector.broadcast %cst_6 : f32 to vector<8x256xf32>
    %44 = arith.addf %43, %42 : vector<8x256xf32>
    %45 = arith.divf %43, %44 : vector<8x256xf32>
    %46 = arith.mulf %40, %45 : vector<8x256xf32>
    %cst_7 = arith.constant 0.000000e+00 : f32
    %47 = vector.broadcast %cst_7 : f32 to vector<8x256xf32>
    %c17_i32 = arith.constant 17 : i32
    %48 = tpu.dynamic_rotate %46 by %c17_i32 dim 1 : vector<8x256xf32>, i32 -> vector<8x256xf32>
    %49 = vector.extract_strided_slice %1 {offsets = [0, 0], sizes = [1, 256], strides = [1, 1]} : vector<9x256xf32> to vector<1x256xf32>
    %50 = vector.broadcast %49 : vector<1x256xf32> to vector<8x256xf32>
    %51 = arith.mulf %48, %50 : vector<8x256xf32>
    %52 = vector.extract_strided_slice %4 {offsets = [0, 0], sizes = [8, 1], strides = [1, 1]} : vector<8x9xf32> to vector<8x1xf32>
    %53 = vector.broadcast %52 : vector<8x1xf32> to vector<8x256xf32>
    %54 = arith.mulf %51, %53 : vector<8x256xf32>
    %55 = arith.addf %47, %54 : vector<8x256xf32>
    %c16_i32 = arith.constant 16 : i32
    %56 = tpu.dynamic_rotate %46 by %c16_i32 dim 1 : vector<8x256xf32>, i32 -> vector<8x256xf32>
    %57 = vector.extract_strided_slice %1 {offsets = [1, 0], sizes = [1, 256], strides = [1, 1]} : vector<9x256xf32> to vector<1x256xf32>
    %58 = vector.broadcast %57 : vector<1x256xf32> to vector<8x256xf32>
    %59 = arith.mulf %56, %58 : vector<8x256xf32>
    %60 = vector.extract_strided_slice %4 {offsets = [0, 1], sizes = [8, 1], strides = [1, 1]} : vector<8x9xf32> to vector<8x1xf32>
    %61 = vector.broadcast %60 : vector<8x1xf32> to vector<8x256xf32>
    %62 = arith.mulf %59, %61 : vector<8x256xf32>
    %63 = arith.addf %55, %62 : vector<8x256xf32>
    %c15_i32 = arith.constant 15 : i32
    %64 = tpu.dynamic_rotate %46 by %c15_i32 dim 1 : vector<8x256xf32>, i32 -> vector<8x256xf32>
    %65 = vector.extract_strided_slice %1 {offsets = [2, 0], sizes = [1, 256], strides = [1, 1]} : vector<9x256xf32> to vector<1x256xf32>
    %66 = vector.broadcast %65 : vector<1x256xf32> to vector<8x256xf32>
    %67 = arith.mulf %64, %66 : vector<8x256xf32>
    %68 = vector.extract_strided_slice %4 {offsets = [0, 2], sizes = [8, 1], strides = [1, 1]} : vector<8x9xf32> to vector<8x1xf32>
    %69 = vector.broadcast %68 : vector<8x1xf32> to vector<8x256xf32>
    %70 = arith.mulf %67, %69 : vector<8x256xf32>
    %71 = arith.addf %63, %70 : vector<8x256xf32>
    %c1_i32 = arith.constant 1 : i32
    %72 = tpu.dynamic_rotate %46 by %c1_i32 dim 1 : vector<8x256xf32>, i32 -> vector<8x256xf32>
    %73 = vector.extract_strided_slice %1 {offsets = [3, 0], sizes = [1, 256], strides = [1, 1]} : vector<9x256xf32> to vector<1x256xf32>
    %74 = vector.broadcast %73 : vector<1x256xf32> to vector<8x256xf32>
    %75 = arith.mulf %72, %74 : vector<8x256xf32>
    %76 = vector.extract_strided_slice %4 {offsets = [0, 3], sizes = [8, 1], strides = [1, 1]} : vector<8x9xf32> to vector<8x1xf32>
    %77 = vector.broadcast %76 : vector<8x1xf32> to vector<8x256xf32>
    %78 = arith.mulf %75, %77 : vector<8x256xf32>
    %79 = arith.addf %71, %78 : vector<8x256xf32>
    %80 = vector.extract_strided_slice %4 {offsets = [0, 4], sizes = [8, 1], strides = [1, 1]} : vector<8x9xf32> to vector<8x1xf32>
    %81 = vector.broadcast %80 : vector<8x1xf32> to vector<8x256xf32>
    %82 = arith.mulf %46, %81 : vector<8x256xf32>
    %83 = arith.addf %79, %82 : vector<8x256xf32>
    %c255_i32 = arith.constant 255 : i32
    %84 = tpu.dynamic_rotate %46 by %c255_i32 dim 1 : vector<8x256xf32>, i32 -> vector<8x256xf32>
    %85 = vector.extract_strided_slice %1 {offsets = [5, 0], sizes = [1, 256], strides = [1, 1]} : vector<9x256xf32> to vector<1x256xf32>
    %86 = vector.broadcast %85 : vector<1x256xf32> to vector<8x256xf32>
    %87 = arith.mulf %84, %86 : vector<8x256xf32>
    %88 = vector.extract_strided_slice %4 {offsets = [0, 5], sizes = [8, 1], strides = [1, 1]} : vector<8x9xf32> to vector<8x1xf32>
    %89 = vector.broadcast %88 : vector<8x1xf32> to vector<8x256xf32>
    %90 = arith.mulf %87, %89 : vector<8x256xf32>
    %91 = arith.addf %83, %90 : vector<8x256xf32>
    %c241_i32 = arith.constant 241 : i32
    %92 = tpu.dynamic_rotate %46 by %c241_i32 dim 1 : vector<8x256xf32>, i32 -> vector<8x256xf32>
    %93 = vector.extract_strided_slice %1 {offsets = [6, 0], sizes = [1, 256], strides = [1, 1]} : vector<9x256xf32> to vector<1x256xf32>
    %94 = vector.broadcast %93 : vector<1x256xf32> to vector<8x256xf32>
    %95 = arith.mulf %92, %94 : vector<8x256xf32>
    %96 = vector.extract_strided_slice %4 {offsets = [0, 6], sizes = [8, 1], strides = [1, 1]} : vector<8x9xf32> to vector<8x1xf32>
    %97 = vector.broadcast %96 : vector<8x1xf32> to vector<8x256xf32>
    %98 = arith.mulf %95, %97 : vector<8x256xf32>
    %99 = arith.addf %91, %98 : vector<8x256xf32>
    %c240_i32 = arith.constant 240 : i32
    %100 = tpu.dynamic_rotate %46 by %c240_i32 dim 1 : vector<8x256xf32>, i32 -> vector<8x256xf32>
    %101 = vector.extract_strided_slice %1 {offsets = [7, 0], sizes = [1, 256], strides = [1, 1]} : vector<9x256xf32> to vector<1x256xf32>
    %102 = vector.broadcast %101 : vector<1x256xf32> to vector<8x256xf32>
    %103 = arith.mulf %100, %102 : vector<8x256xf32>
    %104 = vector.extract_strided_slice %4 {offsets = [0, 7], sizes = [8, 1], strides = [1, 1]} : vector<8x9xf32> to vector<8x1xf32>
    %105 = vector.broadcast %104 : vector<8x1xf32> to vector<8x256xf32>
    %106 = arith.mulf %103, %105 : vector<8x256xf32>
    %107 = arith.addf %99, %106 : vector<8x256xf32>
    %c239_i32 = arith.constant 239 : i32
    %108 = tpu.dynamic_rotate %46 by %c239_i32 dim 1 : vector<8x256xf32>, i32 -> vector<8x256xf32>
    %109 = vector.extract_strided_slice %1 {offsets = [8, 0], sizes = [1, 256], strides = [1, 1]} : vector<9x256xf32> to vector<1x256xf32>
    %110 = vector.broadcast %109 : vector<1x256xf32> to vector<8x256xf32>
    %111 = arith.mulf %108, %110 : vector<8x256xf32>
    %112 = vector.extract_strided_slice %4 {offsets = [0, 8], sizes = [8, 1], strides = [1, 1]} : vector<8x9xf32> to vector<8x1xf32>
    %113 = vector.broadcast %112 : vector<8x1xf32> to vector<8x256xf32>
    %114 = arith.mulf %111, %113 : vector<8x256xf32>
    %115 = arith.addf %107, %114 : vector<8x256xf32>
    %116 = vector.broadcast %5 : vector<8x1xf32> to vector<8x256xf32>
    %117 = arith.addf %115, %116 : vector<8x256xf32>
    %118 = arith.negf %117 : vector<8x256xf32>
    %119 = math.exp %118 : vector<8x256xf32>
    %cst_8 = arith.constant 1.000000e+00 : f32
    %120 = vector.broadcast %cst_8 : f32 to vector<8x256xf32>
    %121 = arith.addf %120, %119 : vector<8x256xf32>
    %122 = arith.divf %120, %121 : vector<8x256xf32>
    %123 = arith.mulf %117, %122 : vector<8x256xf32>
    %cst_9 = arith.constant dense<0.000000e+00> : vector<8xf32>
    %124 = vector.multi_reduction <add>, %123, %cst_9 [1] : vector<8x256xf32> to vector<8xf32>
    %125 = vector.shape_cast %124 : vector<8xf32> to vector<8x1xf32>
    %cst_10 = arith.constant 2.560000e+02 : f32
    %126 = vector.broadcast %cst_10 : f32 to vector<8x1xf32>
    %127 = arith.divf %125, %126 : vector<8x1xf32>
    %128 = vector.broadcast %127 : vector<8x1xf32> to vector<8x2xf32>
    %129 = arith.mulf %6, %128 : vector<8x2xf32>
    %cst_11 = arith.constant dense<0.000000e+00> : vector<2xf32>
    %130 = vector.multi_reduction <add>, %129, %cst_11 [0] : vector<8x2xf32> to vector<2xf32>
    %131 = vector.shape_cast %130 : vector<2xf32> to vector<1x2xf32>
    %132 = arith.addf %131, %7 : vector<1x2xf32>
    %133 = arith.negf %132 : vector<1x2xf32>
    %134 = math.exp %133 : vector<1x2xf32>
    %cst_12 = arith.constant 1.000000e+00 : f32
    %135 = vector.broadcast %cst_12 : f32 to vector<1x2xf32>
    %136 = arith.addf %135, %134 : vector<1x2xf32>
    %137 = arith.divf %135, %136 : vector<1x2xf32>
    %138 = arith.mulf %132, %137 : vector<1x2xf32>
    %139 = vector.broadcast %138 : vector<1x2xf32> to vector<8x2xf32>
    %140 = arith.mulf %8, %139 : vector<8x2xf32>
    %cst_13 = arith.constant dense<0.000000e+00> : vector<8xf32>
    %141 = vector.multi_reduction <add>, %140, %cst_13 [1] : vector<8x2xf32> to vector<8xf32>
    %142 = vector.shape_cast %141 : vector<8xf32> to vector<8x1xf32>
    %143 = arith.addf %142, %9 : vector<8x1xf32>
    %144 = arith.negf %143 : vector<8x1xf32>
    %145 = math.exp %144 : vector<8x1xf32>
    %cst_14 = arith.constant 1.000000e+00 : f32
    %146 = vector.broadcast %cst_14 : f32 to vector<8x1xf32>
    %147 = arith.addf %146, %145 : vector<8x1xf32>
    %148 = arith.divf %146, %147 : vector<8x1xf32>
    %cst_15 = arith.constant 0.000000e+00 : f32
    %149 = vector.broadcast %cst_15 : f32 to vector<4x256xf32>
    %150 = vector.extract_strided_slice %10 {offsets = [0, 0], sizes = [4, 1], strides = [1, 1]} : vector<4x8xf32> to vector<4x1xf32>
    %151 = vector.extract_strided_slice %148 {offsets = [0, 0], sizes = [1, 1], strides = [1, 1]} : vector<8x1xf32> to vector<1x1xf32>
    %152 = vector.broadcast %151 : vector<1x1xf32> to vector<4x1xf32>
    %153 = arith.mulf %150, %152 : vector<4x1xf32>
    %154 = vector.extract_strided_slice %123 {offsets = [0, 0], sizes = [1, 256], strides = [1, 1]} : vector<8x256xf32> to vector<1x256xf32>
    %155 = vector.broadcast %153 : vector<4x1xf32> to vector<4x256xf32>
    %156 = vector.broadcast %154 : vector<1x256xf32> to vector<4x256xf32>
    %157 = arith.mulf %155, %156 : vector<4x256xf32>
    %158 = arith.addf %149, %157 : vector<4x256xf32>
    %159 = vector.extract_strided_slice %10 {offsets = [0, 1], sizes = [4, 1], strides = [1, 1]} : vector<4x8xf32> to vector<4x1xf32>
    %160 = vector.extract_strided_slice %148 {offsets = [1, 0], sizes = [1, 1], strides = [1, 1]} : vector<8x1xf32> to vector<1x1xf32>
    %161 = vector.broadcast %160 : vector<1x1xf32> to vector<4x1xf32>
    %162 = arith.mulf %159, %161 : vector<4x1xf32>
    %163 = vector.extract_strided_slice %123 {offsets = [1, 0], sizes = [1, 256], strides = [1, 1]} : vector<8x256xf32> to vector<1x256xf32>
    %164 = vector.broadcast %162 : vector<4x1xf32> to vector<4x256xf32>
    %165 = vector.broadcast %163 : vector<1x256xf32> to vector<4x256xf32>
    %166 = arith.mulf %164, %165 : vector<4x256xf32>
    %167 = arith.addf %158, %166 : vector<4x256xf32>
    %168 = vector.extract_strided_slice %10 {offsets = [0, 2], sizes = [4, 1], strides = [1, 1]} : vector<4x8xf32> to vector<4x1xf32>
    %169 = vector.extract_strided_slice %148 {offsets = [2, 0], sizes = [1, 1], strides = [1, 1]} : vector<8x1xf32> to vector<1x1xf32>
    %170 = vector.broadcast %169 : vector<1x1xf32> to vector<4x1xf32>
    %171 = arith.mulf %168, %170 : vector<4x1xf32>
    %172 = vector.extract_strided_slice %123 {offsets = [2, 0], sizes = [1, 256], strides = [1, 1]} : vector<8x256xf32> to vector<1x256xf32>
    %173 = vector.broadcast %171 : vector<4x1xf32> to vector<4x256xf32>
    %174 = vector.broadcast %172 : vector<1x256xf32> to vector<4x256xf32>
    %175 = arith.mulf %173, %174 : vector<4x256xf32>
    %176 = arith.addf %167, %175 : vector<4x256xf32>
    %177 = vector.extract_strided_slice %10 {offsets = [0, 3], sizes = [4, 1], strides = [1, 1]} : vector<4x8xf32> to vector<4x1xf32>
    %178 = vector.extract_strided_slice %148 {offsets = [3, 0], sizes = [1, 1], strides = [1, 1]} : vector<8x1xf32> to vector<1x1xf32>
    %179 = vector.broadcast %178 : vector<1x1xf32> to vector<4x1xf32>
    %180 = arith.mulf %177, %179 : vector<4x1xf32>
    %181 = vector.extract_strided_slice %123 {offsets = [3, 0], sizes = [1, 256], strides = [1, 1]} : vector<8x256xf32> to vector<1x256xf32>
    %182 = vector.broadcast %180 : vector<4x1xf32> to vector<4x256xf32>
    %183 = vector.broadcast %181 : vector<1x256xf32> to vector<4x256xf32>
    %184 = arith.mulf %182, %183 : vector<4x256xf32>
    %185 = arith.addf %176, %184 : vector<4x256xf32>
    %186 = vector.extract_strided_slice %10 {offsets = [0, 4], sizes = [4, 1], strides = [1, 1]} : vector<4x8xf32> to vector<4x1xf32>
    %187 = vector.extract_strided_slice %148 {offsets = [4, 0], sizes = [1, 1], strides = [1, 1]} : vector<8x1xf32> to vector<1x1xf32>
    %188 = vector.broadcast %187 : vector<1x1xf32> to vector<4x1xf32>
    %189 = arith.mulf %186, %188 : vector<4x1xf32>
    %190 = vector.extract_strided_slice %123 {offsets = [4, 0], sizes = [1, 256], strides = [1, 1]} : vector<8x256xf32> to vector<1x256xf32>
    %191 = vector.broadcast %189 : vector<4x1xf32> to vector<4x256xf32>
    %192 = vector.broadcast %190 : vector<1x256xf32> to vector<4x256xf32>
    %193 = arith.mulf %191, %192 : vector<4x256xf32>
    %194 = arith.addf %185, %193 : vector<4x256xf32>
    %195 = vector.extract_strided_slice %10 {offsets = [0, 5], sizes = [4, 1], strides = [1, 1]} : vector<4x8xf32> to vector<4x1xf32>
    %196 = vector.extract_strided_slice %148 {offsets = [5, 0], sizes = [1, 1], strides = [1, 1]} : vector<8x1xf32> to vector<1x1xf32>
    %197 = vector.broadcast %196 : vector<1x1xf32> to vector<4x1xf32>
    %198 = arith.mulf %195, %197 : vector<4x1xf32>
    %199 = vector.extract_strided_slice %123 {offsets = [5, 0], sizes = [1, 256], strides = [1, 1]} : vector<8x256xf32> to vector<1x256xf32>
    %200 = vector.broadcast %198 : vector<4x1xf32> to vector<4x256xf32>
    %201 = vector.broadcast %199 : vector<1x256xf32> to vector<4x256xf32>
    %202 = arith.mulf %200, %201 : vector<4x256xf32>
    %203 = arith.addf %194, %202 : vector<4x256xf32>
    %204 = vector.extract_strided_slice %10 {offsets = [0, 6], sizes = [4, 1], strides = [1, 1]} : vector<4x8xf32> to vector<4x1xf32>
    %205 = vector.extract_strided_slice %148 {offsets = [6, 0], sizes = [1, 1], strides = [1, 1]} : vector<8x1xf32> to vector<1x1xf32>
    %206 = vector.broadcast %205 : vector<1x1xf32> to vector<4x1xf32>
    %207 = arith.mulf %204, %206 : vector<4x1xf32>
    %208 = vector.extract_strided_slice %123 {offsets = [6, 0], sizes = [1, 256], strides = [1, 1]} : vector<8x256xf32> to vector<1x256xf32>
    %209 = vector.broadcast %207 : vector<4x1xf32> to vector<4x256xf32>
    %210 = vector.broadcast %208 : vector<1x256xf32> to vector<4x256xf32>
    %211 = arith.mulf %209, %210 : vector<4x256xf32>
    %212 = arith.addf %203, %211 : vector<4x256xf32>
    %213 = vector.extract_strided_slice %10 {offsets = [0, 7], sizes = [4, 1], strides = [1, 1]} : vector<4x8xf32> to vector<4x1xf32>
    %214 = vector.extract_strided_slice %148 {offsets = [7, 0], sizes = [1, 1], strides = [1, 1]} : vector<8x1xf32> to vector<1x1xf32>
    %215 = vector.broadcast %214 : vector<1x1xf32> to vector<4x1xf32>
    %216 = arith.mulf %213, %215 : vector<4x1xf32>
    %217 = vector.extract_strided_slice %123 {offsets = [7, 0], sizes = [1, 256], strides = [1, 1]} : vector<8x256xf32> to vector<1x256xf32>
    %218 = vector.broadcast %216 : vector<4x1xf32> to vector<4x256xf32>
    %219 = vector.broadcast %217 : vector<1x256xf32> to vector<4x256xf32>
    %220 = arith.mulf %218, %219 : vector<4x256xf32>
    %221 = arith.addf %212, %220 : vector<4x256xf32>
    %222 = vector.broadcast %11 : vector<4x1xf32> to vector<4x256xf32>
    %223 = arith.addf %221, %222 : vector<4x256xf32>
    %224 = arith.addf %223, %13 : vector<4x256xf32>
    %c0_16 = arith.constant 0 : index
    %c0_17 = arith.constant 0 : index
    %c0_18 = arith.constant 0 : index
    %225 = vector.load %arg4[%c0_16, %c0_17, %c0_18] : memref<2x4x256xf32, #tpu.memory_space<vmem>>, vector<1x4x256xf32>
    %226 = vector.shape_cast %225 : vector<1x4x256xf32> to vector<4x256xf32>
    %227 = vector.shape_cast %224 : vector<4x256xf32> to vector<1x4x256xf32>
    tpu.vector_store %arg4[%c0_16, %c0_17, %c0_18], %227 {strides = array<i32>} : memref<2x4x256xf32, #tpu.memory_space<vmem>>, vector<1x4x256xf32>,
    %c1 = arith.constant 1 : index
    %c0_19 = arith.constant 0 : index
    %c0_20 = arith.constant 0 : index
    %228 = vector.load %arg1[%c1, %c0_19, %c0_20] : memref<2x4x256xf32, #tpu.memory_space<vmem>>, vector<1x4x256xf32>
    %229 = vector.shape_cast %228 : vector<1x4x256xf32> to vector<4x256xf32>
    %cst_21 = arith.constant 0.000000e+00 : f32
    %230 = vector.broadcast %cst_21 : f32 to vector<8x256xf32>
    %231 = vector.extract_strided_slice %2 {offsets = [0, 0], sizes = [8, 1], strides = [1, 1]} : vector<8x4xf32> to vector<8x1xf32>
    %232 = vector.extract_strided_slice %229 {offsets = [0, 0], sizes = [1, 256], strides = [1, 1]} : vector<4x256xf32> to vector<1x256xf32>
    %233 = vector.broadcast %231 : vector<8x1xf32> to vector<8x256xf32>
    %234 = vector.broadcast %232 : vector<1x256xf32> to vector<8x256xf32>
    %235 = arith.mulf %233, %234 : vector<8x256xf32>
    %236 = arith.addf %230, %235 : vector<8x256xf32>
    %237 = vector.extract_strided_slice %2 {offsets = [0, 1], sizes = [8, 1], strides = [1, 1]} : vector<8x4xf32> to vector<8x1xf32>
    %238 = vector.extract_strided_slice %229 {offsets = [1, 0], sizes = [1, 256], strides = [1, 1]} : vector<4x256xf32> to vector<1x256xf32>
    %239 = vector.broadcast %237 : vector<8x1xf32> to vector<8x256xf32>
    %240 = vector.broadcast %238 : vector<1x256xf32> to vector<8x256xf32>
    %241 = arith.mulf %239, %240 : vector<8x256xf32>
    %242 = arith.addf %236, %241 : vector<8x256xf32>
    %243 = vector.extract_strided_slice %2 {offsets = [0, 2], sizes = [8, 1], strides = [1, 1]} : vector<8x4xf32> to vector<8x1xf32>
    %244 = vector.extract_strided_slice %229 {offsets = [2, 0], sizes = [1, 256], strides = [1, 1]} : vector<4x256xf32> to vector<1x256xf32>
    %245 = vector.broadcast %243 : vector<8x1xf32> to vector<8x256xf32>
    %246 = vector.broadcast %244 : vector<1x256xf32> to vector<8x256xf32>
    %247 = arith.mulf %245, %246 : vector<8x256xf32>
    %248 = arith.addf %242, %247 : vector<8x256xf32>
    %249 = vector.extract_strided_slice %2 {offsets = [0, 3], sizes = [8, 1], strides = [1, 1]} : vector<8x4xf32> to vector<8x1xf32>
    %250 = vector.extract_strided_slice %229 {offsets = [3, 0], sizes = [1, 256], strides = [1, 1]} : vector<4x256xf32> to vector<1x256xf32>
    %251 = vector.broadcast %249 : vector<8x1xf32> to vector<8x256xf32>
    %252 = vector.broadcast %250 : vector<1x256xf32> to vector<8x256xf32>
    %253 = arith.mulf %251, %252 : vector<8x256xf32>
    %254 = arith.addf %248, %253 : vector<8x256xf32>
    %255 = vector.broadcast %3 : vector<8x1xf32> to vector<8x256xf32>
    %256 = arith.addf %254, %255 : vector<8x256xf32>
    %257 = arith.negf %256 : vector<8x256xf32>
    %258 = math.exp %257 : vector<8x256xf32>
    %cst_22 = arith.constant 1.000000e+00 : f32
    %259 = vector.broadcast %cst_22 : f32 to vector<8x256xf32>
    %260 = arith.addf %259, %258 : vector<8x256xf32>
    %261 = arith.divf %259, %260 : vector<8x256xf32>
    %262 = arith.mulf %256, %261 : vector<8x256xf32>
    %cst_23 = arith.constant 0.000000e+00 : f32
    %263 = vector.broadcast %cst_23 : f32 to vector<8x256xf32>
    %c17_i32_24 = arith.constant 17 : i32
    %264 = tpu.dynamic_rotate %262 by %c17_i32_24 dim 1 : vector<8x256xf32>, i32 -> vector<8x256xf32>
    %265 = vector.extract_strided_slice %1 {offsets = [0, 0], sizes = [1, 256], strides = [1, 1]} : vector<9x256xf32> to vector<1x256xf32>
    %266 = vector.broadcast %265 : vector<1x256xf32> to vector<8x256xf32>
    %267 = arith.mulf %264, %266 : vector<8x256xf32>
    %268 = vector.extract_strided_slice %4 {offsets = [0, 0], sizes = [8, 1], strides = [1, 1]} : vector<8x9xf32> to vector<8x1xf32>
    %269 = vector.broadcast %268 : vector<8x1xf32> to vector<8x256xf32>
    %270 = arith.mulf %267, %269 : vector<8x256xf32>
    %271 = arith.addf %263, %270 : vector<8x256xf32>
    %c16_i32_25 = arith.constant 16 : i32
    %272 = tpu.dynamic_rotate %262 by %c16_i32_25 dim 1 : vector<8x256xf32>, i32 -> vector<8x256xf32>
    %273 = vector.extract_strided_slice %1 {offsets = [1, 0], sizes = [1, 256], strides = [1, 1]} : vector<9x256xf32> to vector<1x256xf32>
    %274 = vector.broadcast %273 : vector<1x256xf32> to vector<8x256xf32>
    %275 = arith.mulf %272, %274 : vector<8x256xf32>
    %276 = vector.extract_strided_slice %4 {offsets = [0, 1], sizes = [8, 1], strides = [1, 1]} : vector<8x9xf32> to vector<8x1xf32>
    %277 = vector.broadcast %276 : vector<8x1xf32> to vector<8x256xf32>
    %278 = arith.mulf %275, %277 : vector<8x256xf32>
    %279 = arith.addf %271, %278 : vector<8x256xf32>
    %c15_i32_26 = arith.constant 15 : i32
    %280 = tpu.dynamic_rotate %262 by %c15_i32_26 dim 1 : vector<8x256xf32>, i32 -> vector<8x256xf32>
    %281 = vector.extract_strided_slice %1 {offsets = [2, 0], sizes = [1, 256], strides = [1, 1]} : vector<9x256xf32> to vector<1x256xf32>
    %282 = vector.broadcast %281 : vector<1x256xf32> to vector<8x256xf32>
    %283 = arith.mulf %280, %282 : vector<8x256xf32>
    %284 = vector.extract_strided_slice %4 {offsets = [0, 2], sizes = [8, 1], strides = [1, 1]} : vector<8x9xf32> to vector<8x1xf32>
    %285 = vector.broadcast %284 : vector<8x1xf32> to vector<8x256xf32>
    %286 = arith.mulf %283, %285 : vector<8x256xf32>
    %287 = arith.addf %279, %286 : vector<8x256xf32>
    %c1_i32_27 = arith.constant 1 : i32
    %288 = tpu.dynamic_rotate %262 by %c1_i32_27 dim 1 : vector<8x256xf32>, i32 -> vector<8x256xf32>
    %289 = vector.extract_strided_slice %1 {offsets = [3, 0], sizes = [1, 256], strides = [1, 1]} : vector<9x256xf32> to vector<1x256xf32>
    %290 = vector.broadcast %289 : vector<1x256xf32> to vector<8x256xf32>
    %291 = arith.mulf %288, %290 : vector<8x256xf32>
    %292 = vector.extract_strided_slice %4 {offsets = [0, 3], sizes = [8, 1], strides = [1, 1]} : vector<8x9xf32> to vector<8x1xf32>
    %293 = vector.broadcast %292 : vector<8x1xf32> to vector<8x256xf32>
    %294 = arith.mulf %291, %293 : vector<8x256xf32>
    %295 = arith.addf %287, %294 : vector<8x256xf32>
    %296 = vector.extract_strided_slice %4 {offsets = [0, 4], sizes = [8, 1], strides = [1, 1]} : vector<8x9xf32> to vector<8x1xf32>
    %297 = vector.broadcast %296 : vector<8x1xf32> to vector<8x256xf32>
    %298 = arith.mulf %262, %297 : vector<8x256xf32>
    %299 = arith.addf %295, %298 : vector<8x256xf32>
    %c255_i32_28 = arith.constant 255 : i32
    %300 = tpu.dynamic_rotate %262 by %c255_i32_28 dim 1 : vector<8x256xf32>, i32 -> vector<8x256xf32>
    %301 = vector.extract_strided_slice %1 {offsets = [5, 0], sizes = [1, 256], strides = [1, 1]} : vector<9x256xf32> to vector<1x256xf32>
    %302 = vector.broadcast %301 : vector<1x256xf32> to vector<8x256xf32>
    %303 = arith.mulf %300, %302 : vector<8x256xf32>
    %304 = vector.extract_strided_slice %4 {offsets = [0, 5], sizes = [8, 1], strides = [1, 1]} : vector<8x9xf32> to vector<8x1xf32>
    %305 = vector.broadcast %304 : vector<8x1xf32> to vector<8x256xf32>
    %306 = arith.mulf %303, %305 : vector<8x256xf32>
    %307 = arith.addf %299, %306 : vector<8x256xf32>
    %c241_i32_29 = arith.constant 241 : i32
    %308 = tpu.dynamic_rotate %262 by %c241_i32_29 dim 1 : vector<8x256xf32>, i32 -> vector<8x256xf32>
    %309 = vector.extract_strided_slice %1 {offsets = [6, 0], sizes = [1, 256], strides = [1, 1]} : vector<9x256xf32> to vector<1x256xf32>
    %310 = vector.broadcast %309 : vector<1x256xf32> to vector<8x256xf32>
    %311 = arith.mulf %308, %310 : vector<8x256xf32>
    %312 = vector.extract_strided_slice %4 {offsets = [0, 6], sizes = [8, 1], strides = [1, 1]} : vector<8x9xf32> to vector<8x1xf32>
    %313 = vector.broadcast %312 : vector<8x1xf32> to vector<8x256xf32>
    %314 = arith.mulf %311, %313 : vector<8x256xf32>
    %315 = arith.addf %307, %314 : vector<8x256xf32>
    %c240_i32_30 = arith.constant 240 : i32
    %316 = tpu.dynamic_rotate %262 by %c240_i32_30 dim 1 : vector<8x256xf32>, i32 -> vector<8x256xf32>
    %317 = vector.extract_strided_slice %1 {offsets = [7, 0], sizes = [1, 256], strides = [1, 1]} : vector<9x256xf32> to vector<1x256xf32>
    %318 = vector.broadcast %317 : vector<1x256xf32> to vector<8x256xf32>
    %319 = arith.mulf %316, %318 : vector<8x256xf32>
    %320 = vector.extract_strided_slice %4 {offsets = [0, 7], sizes = [8, 1], strides = [1, 1]} : vector<8x9xf32> to vector<8x1xf32>
    %321 = vector.broadcast %320 : vector<8x1xf32> to vector<8x256xf32>
    %322 = arith.mulf %319, %321 : vector<8x256xf32>
    %323 = arith.addf %315, %322 : vector<8x256xf32>
    %c239_i32_31 = arith.constant 239 : i32
    %324 = tpu.dynamic_rotate %262 by %c239_i32_31 dim 1 : vector<8x256xf32>, i32 -> vector<8x256xf32>
    %325 = vector.extract_strided_slice %1 {offsets = [8, 0], sizes = [1, 256], strides = [1, 1]} : vector<9x256xf32> to vector<1x256xf32>
    %326 = vector.broadcast %325 : vector<1x256xf32> to vector<8x256xf32>
    %327 = arith.mulf %324, %326 : vector<8x256xf32>
    %328 = vector.extract_strided_slice %4 {offsets = [0, 8], sizes = [8, 1], strides = [1, 1]} : vector<8x9xf32> to vector<8x1xf32>
    %329 = vector.broadcast %328 : vector<8x1xf32> to vector<8x256xf32>
    %330 = arith.mulf %327, %329 : vector<8x256xf32>
    %331 = arith.addf %323, %330 : vector<8x256xf32>
    %332 = vector.broadcast %5 : vector<8x1xf32> to vector<8x256xf32>
    %333 = arith.addf %331, %332 : vector<8x256xf32>
    %334 = arith.negf %333 : vector<8x256xf32>
    %335 = math.exp %334 : vector<8x256xf32>
    %cst_32 = arith.constant 1.000000e+00 : f32
    %336 = vector.broadcast %cst_32 : f32 to vector<8x256xf32>
    %337 = arith.addf %336, %335 : vector<8x256xf32>
    %338 = arith.divf %336, %337 : vector<8x256xf32>
    %339 = arith.mulf %333, %338 : vector<8x256xf32>
    %cst_33 = arith.constant dense<0.000000e+00> : vector<8xf32>
    %340 = vector.multi_reduction <add>, %339, %cst_33 [1] : vector<8x256xf32> to vector<8xf32>
    %341 = vector.shape_cast %340 : vector<8xf32> to vector<8x1xf32>
    %cst_34 = arith.constant 2.560000e+02 : f32
    %342 = vector.broadcast %cst_34 : f32 to vector<8x1xf32>
    %343 = arith.divf %341, %342 : vector<8x1xf32>
    %344 = vector.broadcast %343 : vector<8x1xf32> to vector<8x2xf32>
    %345 = arith.mulf %6, %344 : vector<8x2xf32>
    %cst_35 = arith.constant dense<0.000000e+00> : vector<2xf32>
    %346 = vector.multi_reduction <add>, %345, %cst_35 [0] : vector<8x2xf32> to vector<2xf32>
    %347 = vector.shape_cast %346 : vector<2xf32> to vector<1x2xf32>
    %348 = arith.addf %347, %7 : vector<1x2xf32>
    %349 = arith.negf %348 : vector<1x2xf32>
    %350 = math.exp %349 : vector<1x2xf32>
    %cst_36 = arith.constant 1.000000e+00 : f32
    %351 = vector.broadcast %cst_36 : f32 to vector<1x2xf32>
    %352 = arith.addf %351, %350 : vector<1x2xf32>
    %353 = arith.divf %351, %352 : vector<1x2xf32>
    %354 = arith.mulf %348, %353 : vector<1x2xf32>
    %355 = vector.broadcast %354 : vector<1x2xf32> to vector<8x2xf32>
    %356 = arith.mulf %8, %355 : vector<8x2xf32>
    %cst_37 = arith.constant dense<0.000000e+00> : vector<8xf32>
    %357 = vector.multi_reduction <add>, %356, %cst_37 [1] : vector<8x2xf32> to vector<8xf32>
    %358 = vector.shape_cast %357 : vector<8xf32> to vector<8x1xf32>
    %359 = arith.addf %358, %9 : vector<8x1xf32>
    %360 = arith.negf %359 : vector<8x1xf32>
    %361 = math.exp %360 : vector<8x1xf32>
    %cst_38 = arith.constant 1.000000e+00 : f32
    %362 = vector.broadcast %cst_38 : f32 to vector<8x1xf32>
    %363 = arith.addf %362, %361 : vector<8x1xf32>
    %364 = arith.divf %362, %363 : vector<8x1xf32>
    %cst_39 = arith.constant 0.000000e+00 : f32
    %365 = vector.broadcast %cst_39 : f32 to vector<4x256xf32>
    %366 = vector.extract_strided_slice %10 {offsets = [0, 0], sizes = [4, 1], strides = [1, 1]} : vector<4x8xf32> to vector<4x1xf32>
    %367 = vector.extract_strided_slice %364 {offsets = [0, 0], sizes = [1, 1], strides = [1, 1]} : vector<8x1xf32> to vector<1x1xf32>
    %368 = vector.broadcast %367 : vector<1x1xf32> to vector<4x1xf32>
    %369 = arith.mulf %366, %368 : vector<4x1xf32>
    %370 = vector.extract_strided_slice %339 {offsets = [0, 0], sizes = [1, 256], strides = [1, 1]} : vector<8x256xf32> to vector<1x256xf32>
    %371 = vector.broadcast %369 : vector<4x1xf32> to vector<4x256xf32>
    %372 = vector.broadcast %370 : vector<1x256xf32> to vector<4x256xf32>
    %373 = arith.mulf %371, %372 : vector<4x256xf32>
    %374 = arith.addf %365, %373 : vector<4x256xf32>
    %375 = vector.extract_strided_slice %10 {offsets = [0, 1], sizes = [4, 1], strides = [1, 1]} : vector<4x8xf32> to vector<4x1xf32>
    %376 = vector.extract_strided_slice %364 {offsets = [1, 0], sizes = [1, 1], strides = [1, 1]} : vector<8x1xf32> to vector<1x1xf32>
    %377 = vector.broadcast %376 : vector<1x1xf32> to vector<4x1xf32>
    %378 = arith.mulf %375, %377 : vector<4x1xf32>
    %379 = vector.extract_strided_slice %339 {offsets = [1, 0], sizes = [1, 256], strides = [1, 1]} : vector<8x256xf32> to vector<1x256xf32>
    %380 = vector.broadcast %378 : vector<4x1xf32> to vector<4x256xf32>
    %381 = vector.broadcast %379 : vector<1x256xf32> to vector<4x256xf32>
    %382 = arith.mulf %380, %381 : vector<4x256xf32>
    %383 = arith.addf %374, %382 : vector<4x256xf32>
    %384 = vector.extract_strided_slice %10 {offsets = [0, 2], sizes = [4, 1], strides = [1, 1]} : vector<4x8xf32> to vector<4x1xf32>
    %385 = vector.extract_strided_slice %364 {offsets = [2, 0], sizes = [1, 1], strides = [1, 1]} : vector<8x1xf32> to vector<1x1xf32>
    %386 = vector.broadcast %385 : vector<1x1xf32> to vector<4x1xf32>
    %387 = arith.mulf %384, %386 : vector<4x1xf32>
    %388 = vector.extract_strided_slice %339 {offsets = [2, 0], sizes = [1, 256], strides = [1, 1]} : vector<8x256xf32> to vector<1x256xf32>
    %389 = vector.broadcast %387 : vector<4x1xf32> to vector<4x256xf32>
    %390 = vector.broadcast %388 : vector<1x256xf32> to vector<4x256xf32>
    %391 = arith.mulf %389, %390 : vector<4x256xf32>
    %392 = arith.addf %383, %391 : vector<4x256xf32>
    %393 = vector.extract_strided_slice %10 {offsets = [0, 3], sizes = [4, 1], strides = [1, 1]} : vector<4x8xf32> to vector<4x1xf32>
    %394 = vector.extract_strided_slice %364 {offsets = [3, 0], sizes = [1, 1], strides = [1, 1]} : vector<8x1xf32> to vector<1x1xf32>
    %395 = vector.broadcast %394 : vector<1x1xf32> to vector<4x1xf32>
    %396 = arith.mulf %393, %395 : vector<4x1xf32>
    %397 = vector.extract_strided_slice %339 {offsets = [3, 0], sizes = [1, 256], strides = [1, 1]} : vector<8x256xf32> to vector<1x256xf32>
    %398 = vector.broadcast %396 : vector<4x1xf32> to vector<4x256xf32>
    %399 = vector.broadcast %397 : vector<1x256xf32> to vector<4x256xf32>
    %400 = arith.mulf %398, %399 : vector<4x256xf32>
    %401 = arith.addf %392, %400 : vector<4x256xf32>
    %402 = vector.extract_strided_slice %10 {offsets = [0, 4], sizes = [4, 1], strides = [1, 1]} : vector<4x8xf32> to vector<4x1xf32>
    %403 = vector.extract_strided_slice %364 {offsets = [4, 0], sizes = [1, 1], strides = [1, 1]} : vector<8x1xf32> to vector<1x1xf32>
    %404 = vector.broadcast %403 : vector<1x1xf32> to vector<4x1xf32>
    %405 = arith.mulf %402, %404 : vector<4x1xf32>
    %406 = vector.extract_strided_slice %339 {offsets = [4, 0], sizes = [1, 256], strides = [1, 1]} : vector<8x256xf32> to vector<1x256xf32>
    %407 = vector.broadcast %405 : vector<4x1xf32> to vector<4x256xf32>
    %408 = vector.broadcast %406 : vector<1x256xf32> to vector<4x256xf32>
    %409 = arith.mulf %407, %408 : vector<4x256xf32>
    %410 = arith.addf %401, %409 : vector<4x256xf32>
    %411 = vector.extract_strided_slice %10 {offsets = [0, 5], sizes = [4, 1], strides = [1, 1]} : vector<4x8xf32> to vector<4x1xf32>
    %412 = vector.extract_strided_slice %364 {offsets = [5, 0], sizes = [1, 1], strides = [1, 1]} : vector<8x1xf32> to vector<1x1xf32>
    %413 = vector.broadcast %412 : vector<1x1xf32> to vector<4x1xf32>
    %414 = arith.mulf %411, %413 : vector<4x1xf32>
    %415 = vector.extract_strided_slice %339 {offsets = [5, 0], sizes = [1, 256], strides = [1, 1]} : vector<8x256xf32> to vector<1x256xf32>
    %416 = vector.broadcast %414 : vector<4x1xf32> to vector<4x256xf32>
    %417 = vector.broadcast %415 : vector<1x256xf32> to vector<4x256xf32>
    %418 = arith.mulf %416, %417 : vector<4x256xf32>
    %419 = arith.addf %410, %418 : vector<4x256xf32>
    %420 = vector.extract_strided_slice %10 {offsets = [0, 6], sizes = [4, 1], strides = [1, 1]} : vector<4x8xf32> to vector<4x1xf32>
    %421 = vector.extract_strided_slice %364 {offsets = [6, 0], sizes = [1, 1], strides = [1, 1]} : vector<8x1xf32> to vector<1x1xf32>
    %422 = vector.broadcast %421 : vector<1x1xf32> to vector<4x1xf32>
    %423 = arith.mulf %420, %422 : vector<4x1xf32>
    %424 = vector.extract_strided_slice %339 {offsets = [6, 0], sizes = [1, 256], strides = [1, 1]} : vector<8x256xf32> to vector<1x256xf32>
    %425 = vector.broadcast %423 : vector<4x1xf32> to vector<4x256xf32>
    %426 = vector.broadcast %424 : vector<1x256xf32> to vector<4x256xf32>
    %427 = arith.mulf %425, %426 : vector<4x256xf32>
    %428 = arith.addf %419, %427 : vector<4x256xf32>
    %429 = vector.extract_strided_slice %10 {offsets = [0, 7], sizes = [4, 1], strides = [1, 1]} : vector<4x8xf32> to vector<4x1xf32>
    %430 = vector.extract_strided_slice %364 {offsets = [7, 0], sizes = [1, 1], strides = [1, 1]} : vector<8x1xf32> to vector<1x1xf32>
    %431 = vector.broadcast %430 : vector<1x1xf32> to vector<4x1xf32>
    %432 = arith.mulf %429, %431 : vector<4x1xf32>
    %433 = vector.extract_strided_slice %339 {offsets = [7, 0], sizes = [1, 256], strides = [1, 1]} : vector<8x256xf32> to vector<1x256xf32>
    %434 = vector.broadcast %432 : vector<4x1xf32> to vector<4x256xf32>
    %435 = vector.broadcast %433 : vector<1x256xf32> to vector<4x256xf32>
    %436 = arith.mulf %434, %435 : vector<4x256xf32>
    %437 = arith.addf %428, %436 : vector<4x256xf32>
    %438 = vector.broadcast %11 : vector<4x1xf32> to vector<4x256xf32>
    %439 = arith.addf %437, %438 : vector<4x256xf32>
    %440 = arith.addf %439, %229 : vector<4x256xf32>
    %c1_40 = arith.constant 1 : index
    %c0_41 = arith.constant 0 : index
    %c0_42 = arith.constant 0 : index
    %441 = vector.load %arg4[%c1_40, %c0_41, %c0_42] : memref<2x4x256xf32, #tpu.memory_space<vmem>>, vector<1x4x256xf32>
    %442 = vector.shape_cast %441 : vector<1x4x256xf32> to vector<4x256xf32>
    %443 = vector.shape_cast %440 : vector<4x256xf32> to vector<1x4x256xf32>
    tpu.vector_store %arg4[%c1_40, %c0_41, %c0_42], %443 {strides = array<i32>} : memref<2x4x256xf32, #tpu.memory_space<vmem>>, vector<1x4x256xf32>,
    return
  }
  func.func @transform_0(%arg0: i32) -> (i32, i32, i32) {
    %c0_i32 = arith.constant 0 : i32
    %c0_i32_0 = arith.constant 0 : i32
    %c0_i32_1 = arith.constant 0 : i32
    return %arg0, %c0_i32, %c0_i32_0 : i32, i32, i32
  }
  func.func @transform_1(%arg0: i32) -> (i32, i32) {
    %c0_i32 = arith.constant 0 : i32
    %c0_i32_0 = arith.constant 0 : i32
    %c0_i32_1 = arith.constant 0 : i32
    return %c0_i32, %c0_i32_0 : i32, i32
  }
  func.func @transform_2(%arg0: i32) -> (i32, i32) {
    %c0_i32 = arith.constant 0 : i32
    %c0_i32_0 = arith.constant 0 : i32
    %c0_i32_1 = arith.constant 0 : i32
    return %c0_i32, %c0_i32_0 : i32, i32
  }
  func.func @transform_3(%arg0: i32) -> (i32, i32, i32) {
    %c0_i32 = arith.constant 0 : i32
    %c0_i32_0 = arith.constant 0 : i32
    %c0_i32_1 = arith.constant 0 : i32
    return %arg0, %c0_i32, %c0_i32_0 : i32, i32, i32
  }
}

</mosaic_0001>

<llo_original>
// kernel: mbconv_forward.1
$region0: #{mbconv_forward.1}
  #allocation0 [shape = 'u32[]', space=smem, size = 0x4, offset = 0x4, fixed_abs, tag = 'smem constant byte address 0x4 - core index']
  #allocation1 [shape = 'u32[144,128]{1,0:T(1,128)}', space=vmem, size = 0x12000, scoped, tag = 'internal scratch']
  %s0 = inlined_call_operand.vmem [shape: f32[4,4,256], index: 0, kind: input, shape index: {}]
  %s1 = inlined_call_operand.vmem [shape: f32[8,31], index: 1, kind: input, shape index: {}]
  %s2 = inlined_call_operand.vmem [shape: f32[9,256], index: 2, kind: input, shape index: {}]
  %s3 = inlined_call_operand.vmem [shape: f32[4,4,256], index: 3, kind: output, shape index: {}]
  %s4 = sld [smem:[#allocation0]]
  $region45: #{mbconv_forward.1} parent=0
    _
  %s6 = ssub.s32 1, %s4
  %s7 = scalar_select 0, %s6, %s4
  loop: start=0, step=1, limit=4
  $region2: #{mbconv_forward.1} parent=0 // loop_pre_header
    _
  $region3: #{mbconv_forward.1} parent=0 // loop_header
    %s9 = sphi 0, %s13
    %p10 = scmp.ge.s32.totalorder %s9, 4
    %s19 = sphi 0, %s21
    %s22 = sphi 0, %s19
    %s23 = sphi 0, %s22
    %s39 = sphi 0, %s23
    %s43 = sphi 0, %s43
    %s45 = sphi 0, %s43
    %s46 = sphi 0, %s45
    %s60 = sphi 0, %s46
    %s64 = sphi 0, %s64
    %s66 = sphi 0, %s64
    %s67 = sphi 0, %s66
    %s81 = sphi 0, %s67
    %s87 = sphi 0, %s89
    %s90 = sphi 0, %s87
    %s91 = sphi 0, %s90
    %s107 = sphi 0, %s91
  $region4: #{mbconv_forward.1} parent=0 // loop_header_branch
    %12 = sbr.rel (%p10) target = $region8
  $region5: #{mbconv_forward.1} parent=0 // loop_body
    %s14 = ssub.s32 %s9, 1
    %s15 = ssub.s32 %s9, 2
    %s16 = sadd.s32 %s9, 1
    %s17 = ssub.s32 %s9, %s16
    %p18 = scmp.eq.s32.totalorder %s17, 0
    %s20 = sadd.s32 %s19, 1
    %s21 = scalar_select %p18, %s19, %s20
    %p24 = pneg %p18
    %p25 = scmp.eq.s32.totalorder %s9, 1
    %p26 = por %p24, %p25
    %p27 = scmp.ne.s32.totalorder %s19, %s22
    %p28 = scmp.eq.s32.totalorder %s9, 0
    %p29 = por %p27, %p28
    %p30 = scmp.ne.s32.totalorder %s19, %s22
    %p31 = scmp.eq.s32.totalorder %s14, 1
    %p32 = por %p30, %p31
    %p33 = scmp.ne.s32.totalorder %s22, %s23
    %p34 = scmp.eq.s32.totalorder %s14, 0
    %p35 = por %p33, %p34
    %p36 = scmp.ne.s32.totalorder %s22, %s23
    %p37 = scmp.eq.s32.totalorder %s15, 1
    %p38 = por %p36, %p37
    %p40 = scmp.ne.s32.totalorder %s23, %s39
    %p41 = scmp.eq.s32.totalorder %s15, 0
    %p42 = por %p40, %p41
    %s44 = sadd.s32 %s43, 1
    %p47 = scmp.eq.s32.totalorder %s9, 1
    %p48 = scmp.ne.s32.totalorder %s43, %s45
    %p49 = scmp.eq.s32.totalorder %s9, 0
    %p50 = por %p48, %p49
    %p51 = scmp.ne.s32.totalorder %s43, %s45
    %p52 = scmp.eq.s32.totalorder %s14, 1
    %p53 = por %p51, %p52
    %p54 = scmp.ne.s32.totalorder %s45, %s46
    %p55 = scmp.eq.s32.totalorder %s14, 0
    %p56 = por %p54, %p55
    %p57 = scmp.ne.s32.totalorder %s45, %s46
    %p58 = scmp.eq.s32.totalorder %s15, 1
    %p59 = por %p57, %p58
    %p61 = scmp.ne.s32.totalorder %s46, %s60
    %p62 = scmp.eq.s32.totalorder %s15, 0
    %p63 = por %p61, %p62
    %s65 = sadd.s32 %s64, 1
    %p68 = scmp.eq.s32.totalorder %s9, 1
    %p69 = scmp.ne.s32.totalorder %s64, %s66
    %p70 = scmp.eq.s32.totalorder %s9, 0
    %p71 = por %p69, %p70
    %p72 = scmp.ne.s32.totalorder %s64, %s66
    %p73 = scmp.eq.s32.totalorder %s14, 1
    %p74 = por %p72, %p73
    %p75 = scmp.ne.s32.totalorder %s66, %s67
    %p76 = scmp.eq.s32.totalorder %s14, 0
    %p77 = por %p75, %p76
    %p78 = scmp.ne.s32.totalorder %s66, %s67
    %p79 = scmp.eq.s32.totalorder %s15, 1
    %p80 = por %p78, %p79
    %p82 = scmp.ne.s32.totalorder %s67, %s81
    %p83 = scmp.eq.s32.totalorder %s15, 0
    %p84 = por %p82, %p83
    %s85 = ssub.s32 %s9, %s16
    %p86 = scmp.eq.s32.totalorder %s85, 0
    %s88 = sadd.s32 %s87, 1
    %s89 = scalar_select %p86, %s87, %s88
    %p92 = pneg %p86
    %p93 = scmp.eq.s32.totalorder %s9, 1
    %p94 = por %p92, %p93
    %p95 = scmp.ne.s32.totalorder %s87, %s90
    %p96 = scmp.eq.s32.totalorder %s9, 0
    %p97 = por %p95, %p96
    %p98 = scmp.ne.s32.totalorder %s87, %s90
    %p99 = scmp.eq.s32.totalorder %s14, 1
    %p100 = por %p98, %p99
    %p101 = scmp.ne.s32.totalorder %s90, %s91
    %p102 = scmp.eq.s32.totalorder %s14, 0
    %p103 = por %p101, %p102
    %p104 = scmp.ne.s32.totalorder %s90, %s91
    %p105 = scmp.eq.s32.totalorder %s15, 1
    %p106 = por %p104, %p105
    %p108 = scmp.ne.s32.totalorder %s91, %s107
    %p109 = scmp.eq.s32.totalorder %s15, 0
    %p110 = por %p108, %p109
    %p111 = scmp.le.s32.totalorder 1, %s9
    %p112 = scmp.lt.s32.totalorder %s9, 3
    %p113 = pnand %p111, %p112
    %p114 = pneg %p113
    // Predicated region
    $region9: #{mbconv_forward.1} parent=5 // pred_check
      _
    $region10: #{mbconv_forward.1} parent=5 // pred_check_branch
      %116 = sbr.rel (%p113) target = $region12
    $region11: #{mbconv_forward.1} parent=5 // pred_region
      %s117 = ssub.s32 %s9, 1
      // Predicated region
      $region13: #{mbconv_forward.1} parent=11 // pred_check
        %p118 = pneg %p56
      $region14: #{mbconv_forward.1} parent=11 // pred_check_branch
        %120 = sbr.rel (%p118) target = $region16
      $region15: #{mbconv_forward.1} parent=11 // pred_region
        _
      $region16: #{mbconv_forward.1} parent=11 // pred_fallthru
        _
      // Predicated region
      $region17: #{mbconv_forward.1} parent=11 // pred_check
        %p121 = pneg %p77
      $region18: #{mbconv_forward.1} parent=11 // pred_check_branch
        %123 = sbr.rel (%p121) target = $region20
      $region19: #{mbconv_forward.1} parent=11 // pred_region
        _
      $region20: #{mbconv_forward.1} parent=11 // pred_fallthru
        _
    $region12: #{mbconv_forward.1} parent=5 // pred_fallthru
      _
    %p124 = scmp.lt.s32.totalorder %s9, 2
    // Predicated region
    $region21: #{mbconv_forward.1} parent=5 // pred_check
      %p125 = pneg %p124
    $region22: #{mbconv_forward.1} parent=5 // pred_check_branch
      %127 = sbr.rel (%p125) target = $region24
    $region23: #{mbconv_forward.1} parent=5 // pred_region
      // Predicated region
      $region25: #{mbconv_forward.1} parent=23 // pred_check
        %p128 = pneg %p29
      $region26: #{mbconv_forward.1} parent=23 // pred_check_branch
        %130 = sbr.rel (%p128) target = $region28
      $region27: #{mbconv_forward.1} parent=23 // pred_region
        %s131 = smul.u32 2, %s9
        %p132 = scmp.lt.s32.totalorder %s131, 3
        %s133 = scalar_select %p132, %s131, 3
        %s134 = smul.addr %s133, 2
        %s135 = smul.addr %s134, 4
        %s136 = scalar_lea.vmem %s0, %s135
        %s137 = smul.u32 2, %s9
      $region28: #{mbconv_forward.1} parent=23 // pred_fallthru
        _
    $region24: #{mbconv_forward.1} parent=5 // pred_fallthru
      _
    %p138 = scmp.le.s32.totalorder 1, %s9
    %p139 = scmp.lt.s32.totalorder %s9, 3
    %p140 = pnand %p138, %p139
    %p141 = pneg %p140
    // Predicated region
    $region29: #{mbconv_forward.1} parent=5 // pred_check
      _
    $region30: #{mbconv_forward.1} parent=5 // pred_check_branch
      %143 = sbr.rel (%p140) target = $region32
    $region31: #{mbconv_forward.1} parent=5 // pred_region
      %s144 = ssub.s32 %s9, 1
      %s145 = smul.u32 2, %s14
      %p146 = scmp.lt.s32.totalorder %s145, 3
      %s147 = scalar_select %p146, %s145, 3
      %s148 = smul.addr %s147, 2
      %s149 = smul.addr %s148, 4
      %s150 = scalar_lea.vmem %s0, %s149
      %p151 = pneg %p35
      %p152 = pneg %p32
      %p153 = pneg %p56
      %p154 = pneg %p53
      %p155 = pneg %p77
      %p156 = pneg %p74
      %p157 = pneg %p103
      %p158 = pneg %p100
      %s159 = smul.u32 2, %s14
      %p160 = scmp.lt.s32.totalorder %s159, 3
      %s161 = scalar_select %p160, %s159, 3
      %s162 = smul.addr %s161, 2
      %s163 = smul.addr %s162, 4
      %s164 = scalar_lea.vmem %s3, %s163
      %s165 = smul.u32 2, %s14
      %p166 = scmp.lt.s32.totalorder %s165, 3
      %s167 = scalar_select %p166, %s165, 3
      %s168 = smul.addr %s167, 2
      %s169 = smul.addr %s168, 4
      %s170 = scalar_lea.vmem %s0, %s169
      %s171 = smul.u32 2, %s14
      %s172 = smul.u32 2, %s14
      %p173 = scmp.lt.s32.totalorder %s172, 3
      %s174 = scalar_select %p173, %s172, 3
      %s175 = smul.addr %s174, 2
      %s176 = smul.addr %s175, 4
      %s177 = scalar_lea.vmem %s3, %s176
      %s178 = smul.u32 2, %s14
      %v179 = vld [vmem:[%s1] sm:$0xff]
      %v180 = vld [vmem:[%s2] sm:$0xff]
      %v181 = vld [vmem:[%s2 + $0x8] sm:$0xff]
      %v182 = vld [vmem:[%s2 + $0x10] sm:$0x1]
      %v183 = vld [vmem:[%s2 + $0x18] sm:$0x1]
      %v184 = vld [vmem:[%s170] sm:$0xff]
      %186 = vset.pattern.permute.xlu0 0
      %187 = vperm.xlu0 %186, %v179
      %v188 = vpop.permute.xlu0 %187
      %v191 = vlaneseq
      %v192 = vshrl.u32 %v191, 7
      %v193 = vsub.s32 0, %v192
      %v194 = vrot.slane %v184, %v193
      %v195 = vlaneseq
      %v196 = vshrl.u32 %v195, 7
      %v197 = vsub.s32 4, %v196
      %v198 = vrot.slane %v184, %v197
      %v201 = vlaneseq
      %v202 = vshrl.u32 %v201, 7
      %v203 = vsub.s32 0, %v202
      %v204 = vrot.slane %v194, %v203
      %v205 = vlaneseq
      %v206 = vshrl.u32 %v205, 7
      %v207 = vsub.s32 0, %v206
      %v208 = vrot.slane %v198, %v207
      %v209 = vmul.f32 %v188, %v204
      %v210 = vmul.f32 %v188, %v208
      %v211 = vadd.f32 %v209, 0.0
      %v212 = vadd.f32 %v210, 0.0
      %213 = vset.pattern.permute.xlu0 1
      %214 = vperm.xlu0 %213, %v179
      %v215 = vpop.permute.xlu0 %214
      %v217 = vlaneseq
      %v218 = vshrl.u32 %v217, 7
      %v219 = vsub.s32 1, %v218
      %v220 = vrot.slane %v184, %v219
      %v221 = vlaneseq
      %v222 = vshrl.u32 %v221, 7
      %v223 = vsub.s32 5, %v222
      %v224 = vrot.slane %v184, %v223
      %v227 = vlaneseq
      %v228 = vshrl.u32 %v227, 7
      %v229 = vsub.s32 1, %v228
      %v230 = vrot.slane %v220, %v229
      %v231 = vlaneseq
      %v232 = vshrl.u32 %v231, 7
      %v233 = vsub.s32 1, %v232
      %v234 = vrot.slane %v224, %v233
      %v235 = vmul.f32 %v215, %v230
      %v236 = vmul.f32 %v215, %v234
      %v237 = vadd.f32 %v211, %v235
      %v238 = vadd.f32 %v212, %v236
      %239 = vset.pattern.permute.xlu0 2
      %240 = vperm.xlu0 %239, %v179
      %v241 = vpop.permute.xlu0 %240
      %v243 = vlaneseq
      %v244 = vshrl.u32 %v243, 7
      %v245 = vsub.s32 2, %v244
      %v246 = vrot.slane %v184, %v245
      %v247 = vlaneseq
      %v248 = vshrl.u32 %v247, 7
      %v249 = vsub.s32 6, %v248
      %v250 = vrot.slane %v184, %v249
      %v253 = vlaneseq
      %v254 = vshrl.u32 %v253, 7
      %v255 = vsub.s32 2, %v254
      %v256 = vrot.slane %v246, %v255
      %v257 = vlaneseq
      %v258 = vshrl.u32 %v257, 7
      %v259 = vsub.s32 2, %v258
      %v260 = vrot.slane %v250, %v259
      %v261 = vmul.f32 %v241, %v256
      %v262 = vmul.f32 %v241, %v260
      %v263 = vadd.f32 %v237, %v261
      %v264 = vadd.f32 %v238, %v262
      %265 = vset.pattern.permute.xlu0 3
      %266 = vperm.xlu0 %265, %v179
      %v267 = vpop.permute.xlu0 %266
      %v269 = vlaneseq
      %v270 = vshrl.u32 %v269, 7
      %v271 = vsub.s32 3, %v270
      %v272 = vrot.slane %v184, %v271
      %v273 = vlaneseq
      %v274 = vshrl.u32 %v273, 7
      %v275 = vsub.s32 7, %v274
      %v276 = vrot.slane %v184, %v275
      %v279 = vlaneseq
      %v280 = vshrl.u32 %v279, 7
      %v281 = vsub.s32 3, %v280
      %v282 = vrot.slane %v272, %v281
      %v283 = vlaneseq
      %v284 = vshrl.u32 %v283, 7
      %v285 = vsub.s32 3, %v284
      %v286 = vrot.slane %v276, %v285
      %v287 = vmul.f32 %v267, %v282
      %v288 = vmul.f32 %v267, %v286
      %v289 = vadd.f32 %v263, %v287
      %v290 = vadd.f32 %v264, %v288
      %291 = vset.pattern.permute.xlu0 4
      %292 = vperm.xlu0 %291, %v179
      %v293 = vpop.permute.xlu0 %292
      %v295 = vadd.f32 %v289, %v293
      %v296 = vadd.f32 %v290, %v293
      %v297 = vxor.u32 %v295, 2147483648
      %v298 = vxor.u32 %v296, 2147483648
      %v299 = vmul.f32 %v297, 1.442695
      %v300 = vpow.pop %v299
      %v301 = vmul.f32 %v298, 1.442695
      %v302 = vpow.pop %v301
      %v303 = vadd.f32 %v300, 1.0
      %v304 = vadd.f32 %v302, 1.0
      %v305 = vrcp.pop %v303
      %v306 = vmul.f32 1.0, %v305
      %v307 = vrcp.pop %v304
      %v308 = vmul.f32 1.0, %v307
      %v309 = vmul.f32 %v295, %v306
      %v310 = vmul.f32 %v296, %v308
      %311 = vrot.lane.b32.xlu0 %v309, 17
      %v312 = vpop.permute.xlu0 %311
      %313 = vrot.lane.b32.xlu0 %v310, 17
      %v314 = vpop.permute.xlu0 %313
      %v315 = vlaneseq
      %v316 = vand.u32 %v315, 127
      %vm317 = vcmp.lt.s32.totalorder %v316, 17
      %v318 = vsel %vm317, %v312, %v314
      %v319 = vsel %vm317, %v314, %v312
      %v320 = vlaneseq
      %v321 = vshrl.u32 %v320, 7
      %v322 = vsub.s32 0, %v321
      %v323 = vrot.slane %v180, %v322
      %v324 = vlaneseq
      %v325 = vshrl.u32 %v324, 7
      %v326 = vsub.s32 0, %v325
      %v327 = vrot.slane %v181, %v326
      %v328 = vmul.f32 %v319, %v323
      %v329 = vmul.f32 %v318, %v327
      %330 = vset.pattern.permute.xlu0 5
      %331 = vperm.xlu0 %330, %v179
      %v332 = vpop.permute.xlu0 %331
      %v334 = vmul.f32 %v328, %v332
      %v335 = vmul.f32 %v329, %v332
      %v336 = vadd.f32 %v334, 0.0
      %v337 = vadd.f32 %v335, 0.0
      %338 = vrot.lane.b32.xlu0 %v309, 16
      %v339 = vpop.permute.xlu0 %338
      %340 = vrot.lane.b32.xlu0 %v310, 16
      %v341 = vpop.permute.xlu0 %340
      %vm342 = vcmp.lt.s32.totalorder %v316, 16
      %v343 = vsel %vm342, %v339, %v341
      %v344 = vsel %vm342, %v341, %v339
      %v345 = vlaneseq
      %v346 = vshrl.u32 %v345, 7
      %v347 = vsub.s32 1, %v346
      %v348 = vrot.slane %v180, %v347
      %v349 = vlaneseq
      %v350 = vshrl.u32 %v349, 7
      %v351 = vsub.s32 1, %v350
      %v352 = vrot.slane %v181, %v351
      %v353 = vmul.f32 %v344, %v348
      %v354 = vmul.f32 %v343, %v352
      %355 = vset.pattern.permute.xlu0 6
      %356 = vperm.xlu0 %355, %v179
      %v357 = vpop.permute.xlu0 %356
      %v359 = vmul.f32 %v353, %v357
      %v360 = vmul.f32 %v354, %v357
      %v361 = vadd.f32 %v336, %v359
      %v362 = vadd.f32 %v337, %v360
      %363 = vrot.lane.b32.xlu0 %v309, 15
      %v364 = vpop.permute.xlu0 %363
      %365 = vrot.lane.b32.xlu0 %v310, 15
      %v366 = vpop.permute.xlu0 %365
      %vm367 = vcmp.lt.s32.totalorder %v316, 15
      %v368 = vsel %vm367, %v364, %v366
      %v369 = vsel %vm367, %v366, %v364
      %v370 = vlaneseq
      %v371 = vshrl.u32 %v370, 7
      %v372 = vsub.s32 2, %v371
      %v373 = vrot.slane %v180, %v372
      %v374 = vlaneseq
      %v375 = vshrl.u32 %v374, 7
      %v376 = vsub.s32 2, %v375
      %v377 = vrot.slane %v181, %v376
      %v378 = vmul.f32 %v369, %v373
      %v379 = vmul.f32 %v368, %v377
      %380 = vset.pattern.permute.xlu0 7
      %381 = vperm.xlu0 %380, %v179
      %v382 = vpop.permute.xlu0 %381
      %v384 = vmul.f32 %v378, %v382
      %v385 = vmul.f32 %v379, %v382
      %v386 = vadd.f32 %v361, %v384
      %v387 = vadd.f32 %v362, %v385
      %388 = vrot.lane.b32.xlu0 %v309, 1
      %v389 = vpop.permute.xlu0 %388
      %390 = vrot.lane.b32.xlu0 %v310, 1
      %v391 = vpop.permute.xlu0 %390
      %vm392 = vcmp.lt.s32.totalorder %v316, 1
      %v393 = vsel %vm392, %v389, %v391
      %v394 = vsel %vm392, %v391, %v389
      %v395 = vlaneseq
      %v396 = vshrl.u32 %v395, 7
      %v397 = vsub.s32 3, %v396
      %v398 = vrot.slane %v180, %v397
      %v399 = vlaneseq
      %v400 = vshrl.u32 %v399, 7
      %v401 = vsub.s32 3, %v400
      %v402 = vrot.slane %v181, %v401
      %v403 = vmul.f32 %v394, %v398
      %v404 = vmul.f32 %v393, %v402
      %405 = vset.pattern.permute.xlu0 8
      %406 = vperm.xlu0 %405, %v179
      %v407 = vpop.permute.xlu0 %406
      %v409 = vmul.f32 %v403, %v407
      %v410 = vmul.f32 %v404, %v407
      %v411 = vadd.f32 %v386, %v409
      %v412 = vadd.f32 %v387, %v410
      %413 = vset.pattern.permute.xlu0 9
      %414 = vperm.xlu0 %413, %v179
      %v415 = vpop.permute.xlu0 %414
      %v417 = vmul.f32 %v309, %v415
      %v418 = vmul.f32 %v310, %v415
      %v419 = vadd.f32 %v411, %v417
      %v420 = vadd.f32 %v412, %v418
      %421 = vrot.lane.b32.xlu0 %v309, 127
      %v422 = vpop.permute.xlu0 %421
      %423 = vrot.lane.b32.xlu0 %v310, 127
      %v424 = vpop.permute.xlu0 %423
      %vm425 = vcmp.lt.s32.totalorder %v316, 127
      %v426 = vsel %vm425, %v422, %v424
      %v427 = vsel %vm425, %v424, %v422
      %v428 = vlaneseq
      %v429 = vshrl.u32 %v428, 7
      %v430 = vsub.s32 5, %v429
      %v431 = vrot.slane %v180, %v430
      %v432 = vlaneseq
      %v433 = vshrl.u32 %v432, 7
      %v434 = vsub.s32 5, %v433
      %v435 = vrot.slane %v181, %v434
      %v436 = vmul.f32 %v426, %v431
      %v437 = vmul.f32 %v427, %v435
      %438 = vset.pattern.permute.xlu0 10
      %439 = vperm.xlu0 %438, %v179
      %v440 = vpop.permute.xlu0 %439
      %v442 = vmul.f32 %v436, %v440
      %v443 = vmul.f32 %v437, %v440
      %v444 = vadd.f32 %v419, %v442
      %v445 = vadd.f32 %v420, %v443
      %446 = vrot.lane.b32.xlu0 %v309, 113
      %v447 = vpop.permute.xlu0 %446
      %448 = vrot.lane.b32.xlu0 %v310, 113
      %v449 = vpop.permute.xlu0 %448
      %vm450 = vcmp.lt.s32.totalorder %v316, 113
      %v451 = vsel %vm450, %v447, %v449
      %v452 = vsel %vm450, %v449, %v447
      %v453 = vlaneseq
      %v454 = vshrl.u32 %v453, 7
      %v455 = vsub.s32 6, %v454
      %v456 = vrot.slane %v180, %v455
      %v457 = vlaneseq
      %v458 = vshrl.u32 %v457, 7
      %v459 = vsub.s32 6, %v458
      %v460 = vrot.slane %v181, %v459
      %v461 = vmul.f32 %v451, %v456
      %v462 = vmul.f32 %v452, %v460
      %463 = vset.pattern.permute.xlu0 11
      %464 = vperm.xlu0 %463, %v179
      %v465 = vpop.permute.xlu0 %464
      %v467 = vmul.f32 %v461, %v465
      %v468 = vmul.f32 %v462, %v465
      %v469 = vadd.f32 %v444, %v467
      %v470 = vadd.f32 %v445, %v468
      %471 = vrot.lane.b32.xlu0 %v309, 112
      %v472 = vpop.permute.xlu0 %471
      %473 = vrot.lane.b32.xlu0 %v310, 112
      %v474 = vpop.permute.xlu0 %473
      %vm475 = vcmp.lt.s32.totalorder %v316, 112
      %v476 = vsel %vm475, %v472, %v474
      %v477 = vsel %vm475, %v474, %v472
      %v478 = vlaneseq
      %v479 = vshrl.u32 %v478, 7
      %v480 = vsub.s32 7, %v479
      %v481 = vrot.slane %v180, %v480
      %v482 = vlaneseq
      %v483 = vshrl.u32 %v482, 7
      %v484 = vsub.s32 7, %v483
      %v485 = vrot.slane %v181, %v484
      %v486 = vmul.f32 %v476, %v481
      %v487 = vmul.f32 %v477, %v485
      %488 = vset.pattern.permute.xlu0 12
      %489 = vperm.xlu0 %488, %v179
      %v490 = vpop.permute.xlu0 %489
      %v492 = vmul.f32 %v486, %v490
      %v493 = vmul.f32 %v487, %v490
      %v494 = vadd.f32 %v469, %v492
      %v495 = vadd.f32 %v470, %v493
      %496 = vrot.lane.b32.xlu0 %v309, 111
      %v497 = vpop.permute.xlu0 %496
      %498 = vrot.lane.b32.xlu0 %v310, 111
      %v499 = vpop.permute.xlu0 %498
      %vm500 = vcmp.lt.s32.totalorder %v316, 111
      %v501 = vsel %vm500, %v497, %v499
      %v502 = vsel %vm500, %v499, %v497
      %v503 = vlaneseq
      %v504 = vshrl.u32 %v503, 7
      %v505 = vsub.s32 0, %v504
      %v506 = vrot.slane %v182, %v505
      %v507 = vlaneseq
      %v508 = vshrl.u32 %v507, 7
      %v509 = vsub.s32 0, %v508
      %v510 = vrot.slane %v183, %v509
      %v511 = vmul.f32 %v501, %v506
      %v512 = vmul.f32 %v502, %v510
      %513 = vset.pattern.permute.xlu0 13
      %514 = vperm.xlu0 %513, %v179
      %v515 = vpop.permute.xlu0 %514
      %v517 = vmul.f32 %v511, %v515
      %v518 = vmul.f32 %v512, %v515
      %v519 = vadd.f32 %v494, %v517
      %v520 = vadd.f32 %v495, %v518
      %521 = vset.pattern.permute.xlu0 14
      %522 = vperm.xlu0 %521, %v179
      %v523 = vpop.permute.xlu0 %522
      %v525 = vadd.f32 %v519, %v523
      %v526 = vadd.f32 %v520, %v523
      %v527 = vxor.u32 %v525, 2147483648
      %v528 = vxor.u32 %v526, 2147483648
      %v529 = vmul.f32 %v527, 1.442695
      %v530 = vpow.pop %v529
      %v531 = vmul.f32 %v528, 1.442695
      %v532 = vpow.pop %v531
      %v533 = vadd.f32 %v530, 1.0
      %v534 = vadd.f32 %v532, 1.0
      %v535 = vrcp.pop %v533
      %v536 = vmul.f32 1.0, %v535
      %v537 = vrcp.pop %v534
      %v538 = vmul.f32 1.0, %v537
      %v539 = vmul.f32 %v525, %v536
      %v540 = vmul.f32 %v526, %v538
      %v541 = vadd.f32 %v539, %v540
      %542 = vadd.xlane.f32.xlu0 %v541
      %v543 = vpop.xlane.xlu0 %542
      %v544 = vrcp.pop 256.0
      %v545 = vmul.f32 %v543, %v544
      %v546 = vmul.f32 %v179, %v545
      %vm547 = vcmask 138360
      %v548 = vsel %vm547, %v546, 0.0
      %v549 = vrot.slane %v548, 4
      %v550 = vadd.f32 %v548, %v549
      %v551 = vrot.slane %v550, 2
      %v552 = vadd.f32 %v550, %v551
      %v553 = vrot.slane %v552, 1
      %v554 = vadd.f32 %v552, %v553
      %555 = vrot.lane.b32.xlu0 %v179, 126
      %v556 = vpop.permute.xlu0 %555
      %v558 = vadd.f32 %v554, %v556
      %v559 = vxor.u32 %v558, 2147483648
      %v560 = vmul.f32 %v559, 1.442695
      %v561 = vpow.pop %v560
      %v562 = vadd.f32 %v561, 1.0
      %v563 = vrcp.pop %v562
      %v564 = vmul.f32 1.0, %v563
      %v565 = vmul.f32 %v558, %v564
      %v566 = vlaneseq
      %v567 = vshrl.u32 %v566, 7
      %v568 = vsub.s32 0, %v567
      %v569 = vrot.slane %v565, %v568
      %571 = vrot.lane.b32.xlu0 %v569, 4
      %v572 = vpop.permute.xlu0 %571
      %v574 = vmul.f32 %v179, %v572
      %576 = vrot.lane.b32.xlu0 %v574, 109
      %v577 = vpop.permute.xlu0 %576
      %vm579 = vcmask 15360
      %v580 = vsel %vm579, %v577, 0.0
      %581 = vadd.xlane.f32.xlu0 %v580
      %v582 = vpop.xlane.xlu0 %581
      %v583 = vadd.f32 %v582, %v179
      %v584 = vxor.u32 %v583, 2147483648
      %v585 = vmul.f32 %v584, 1.442695
      %v586 = vpow.pop %v585
      %v587 = vadd.f32 %v586, 1.0
      %v588 = vrcp.pop %v587
      %v589 = vmul.f32 1.0, %v588
      %v590 = vlaneseq
      %v591 = vshrl.u32 %v590, 7
      %v592 = vsub.s32 0, %v591
      %v593 = vrot.slane %v589, %v592
      %595 = vrot.lane.b32.xlu0 %v593, 1
      %v596 = vpop.permute.xlu0 %595
      %v598 = vmul.f32 %v179, %v596
      %600 = vset.pattern.permute.xlu0 22
      %601 = vperm.xlu0 %600, %v598
      %v602 = vpop.permute.xlu0 %601
      %v604 = vlaneseq
      %v605 = vshrl.u32 %v604, 7
      %v606 = vsub.s32 0, %v605
      %v607 = vrot.slane %v539, %v606
      %v608 = vlaneseq
      %v609 = vshrl.u32 %v608, 7
      %v610 = vsub.s32 0, %v609
      %v611 = vrot.slane %v540, %v610
      %v612 = vmul.f32 %v602, %v607
      %v613 = vmul.f32 %v602, %v611
      %v614 = vadd.f32 %v612, 0.0
      %v615 = vadd.f32 %v613, 0.0
      %v616 = vlaneseq
      %v617 = vshrl.u32 %v616, 7
      %v618 = vsub.s32 1, %v617
      %v619 = vrot.slane %v589, %v618
      %621 = vrot.lane.b32.xlu0 %v619, 2
      %v622 = vpop.permute.xlu0 %621
      %v624 = vmul.f32 %v179, %v622
      %626 = vset.pattern.permute.xlu0 23
      %627 = vperm.xlu0 %626, %v624
      %v628 = vpop.permute.xlu0 %627
      %v630 = vlaneseq
      %v631 = vshrl.u32 %v630, 7
      %v632 = vsub.s32 1, %v631
      %v633 = vrot.slane %v539, %v632
      %v634 = vlaneseq
      %v635 = vshrl.u32 %v634, 7
      %v636 = vsub.s32 1, %v635
      %v637 = vrot.slane %v540, %v636
      %v638 = vmul.f32 %v628, %v633
      %v639 = vmul.f32 %v628, %v637
      %v640 = vadd.f32 %v614, %v638
      %v641 = vadd.f32 %v615, %v639
      %v642 = vlaneseq
      %v643 = vshrl.u32 %v642, 7
      %v644 = vsub.s32 2, %v643
      %v645 = vrot.slane %v589, %v644
      %647 = vrot.lane.b32.xlu0 %v645, 3
      %v648 = vpop.permute.xlu0 %647
      %v650 = vmul.f32 %v179, %v648
      %652 = vset.pattern.permute.xlu0 24
      %653 = vperm.xlu0 %652, %v650
      %v654 = vpop.permute.xlu0 %653
      %v656 = vlaneseq
      %v657 = vshrl.u32 %v656, 7
      %v658 = vsub.s32 2, %v657
      %v659 = vrot.slane %v539, %v658
      %v660 = vlaneseq
      %v661 = vshrl.u32 %v660, 7
      %v662 = vsub.s32 2, %v661
      %v663 = vrot.slane %v540, %v662
      %v664 = vmul.f32 %v654, %v659
      %v665 = vmul.f32 %v654, %v663
      %v666 = vadd.f32 %v640, %v664
      %v667 = vadd.f32 %v641, %v665
      %v668 = vlaneseq
      %v669 = vshrl.u32 %v668, 7
      %v670 = vsub.s32 3, %v669
      %v671 = vrot.slane %v589, %v670
      %673 = vrot.lane.b32.xlu0 %v671, 4
      %v674 = vpop.permute.xlu0 %673
      %v676 = vmul.f32 %v179, %v674
      %678 = vset.pattern.permute.xlu0 25
      %679 = vperm.xlu0 %678, %v676
      %v680 = vpop.permute.xlu0 %679
      %v682 = vlaneseq
      %v683 = vshrl.u32 %v682, 7
      %v684 = vsub.s32 3, %v683
      %v685 = vrot.slane %v539, %v684
      %v686 = vlaneseq
      %v687 = vshrl.u32 %v686, 7
      %v688 = vsub.s32 3, %v687
      %v689 = vrot.slane %v540, %v688
      %v690 = vmul.f32 %v680, %v685
      %v691 = vmul.f32 %v680, %v689
      %v692 = vadd.f32 %v666, %v690
      %v693 = vadd.f32 %v667, %v691
      %v694 = vlaneseq
      %v695 = vshrl.u32 %v694, 7
      %v696 = vsub.s32 4, %v695
      %v697 = vrot.slane %v589, %v696
      %699 = vrot.lane.b32.xlu0 %v697, 5
      %v700 = vpop.permute.xlu0 %699
      %v702 = vmul.f32 %v179, %v700
      %704 = vset.pattern.permute.xlu0 26
      %705 = vperm.xlu0 %704, %v702
      %v706 = vpop.permute.xlu0 %705
      %v708 = vlaneseq
      %v709 = vshrl.u32 %v708, 7
      %v710 = vsub.s32 4, %v709
      %v711 = vrot.slane %v539, %v710
      %v712 = vlaneseq
      %v713 = vshrl.u32 %v712, 7
      %v714 = vsub.s32 4, %v713
      %v715 = vrot.slane %v540, %v714
      %v716 = vmul.f32 %v706, %v711
      %v717 = vmul.f32 %v706, %v715
      %v718 = vadd.f32 %v692, %v716
      %v719 = vadd.f32 %v693, %v717
      %v720 = vlaneseq
      %v721 = vshrl.u32 %v720, 7
      %v722 = vsub.s32 5, %v721
      %v723 = vrot.slane %v589, %v722
      %725 = vrot.lane.b32.xlu0 %v723, 6
      %v726 = vpop.permute.xlu0 %725
      %v728 = vmul.f32 %v179, %v726
      %730 = vset.pattern.permute.xlu0 27
      %731 = vperm.xlu0 %730, %v728
      %v732 = vpop.permute.xlu0 %731
      %v734 = vlaneseq
      %v735 = vshrl.u32 %v734, 7
      %v736 = vsub.s32 5, %v735
      %v737 = vrot.slane %v539, %v736
      %v738 = vlaneseq
      %v739 = vshrl.u32 %v738, 7
      %v740 = vsub.s32 5, %v739
      %v741 = vrot.slane %v540, %v740
      %v742 = vmul.f32 %v732, %v737
      %v743 = vmul.f32 %v732, %v741
      %v744 = vadd.f32 %v718, %v742
      %v745 = vadd.f32 %v719, %v743
      %v746 = vlaneseq
      %v747 = vshrl.u32 %v746, 7
      %v748 = vsub.s32 6, %v747
      %v749 = vrot.slane %v589, %v748
      %751 = vrot.lane.b32.xlu0 %v749, 7
      %v752 = vpop.permute.xlu0 %751
      %v754 = vmul.f32 %v179, %v752
      %756 = vset.pattern.permute.xlu0 28
      %757 = vperm.xlu0 %756, %v754
      %v758 = vpop.permute.xlu0 %757
      %v760 = vlaneseq
      %v761 = vshrl.u32 %v760, 7
      %v762 = vsub.s32 6, %v761
      %v763 = vrot.slane %v539, %v762
      %v764 = vlaneseq
      %v765 = vshrl.u32 %v764, 7
      %v766 = vsub.s32 6, %v765
      %v767 = vrot.slane %v540, %v766
      %v768 = vmul.f32 %v758, %v763
      %v769 = vmul.f32 %v758, %v767
      %v770 = vadd.f32 %v744, %v768
      %v771 = vadd.f32 %v745, %v769
      %v772 = vlaneseq
      %v773 = vshrl.u32 %v772, 7
      %v774 = vsub.s32 7, %v773
      %v775 = vrot.slane %v589, %v774
      %777 = vrot.lane.b32.xlu0 %v775, 8
      %v778 = vpop.permute.xlu0 %777
      %v780 = vmul.f32 %v179, %v778
      %782 = vset.pattern.permute.xlu0 29
      %783 = vperm.xlu0 %782, %v780
      %v784 = vpop.permute.xlu0 %783
      %v786 = vlaneseq
      %v787 = vshrl.u32 %v786, 7
      %v788 = vsub.s32 7, %v787
      %v789 = vrot.slane %v539, %v788
      %v790 = vlaneseq
      %v791 = vshrl.u32 %v790, 7
      %v792 = vsub.s32 7, %v791
      %v793 = vrot.slane %v540, %v792
      %v794 = vmul.f32 %v784, %v789
      %v795 = vmul.f32 %v784, %v793
      %v796 = vadd.f32 %v770, %v794
      %v797 = vadd.f32 %v771, %v795
      %798 = vset.pattern.permute.xlu0 30
      %799 = vperm.xlu0 %798, %v179
      %v800 = vpop.permute.xlu0 %799
      %v802 = vadd.f32 %v796, %v800
      %v803 = vadd.f32 %v797, %v800
      %v804 = vcombine.high %v184, %v184
      %v806 = vadd.f32 %v802, %v184
      %v807 = vadd.f32 %v803, %v804
      %v810 = vcombine.low %v806, %v807
      %812 = vst [vmem:[%s177] sm:$0xff] %v810
      %s813 = scalar_lea.vmem %s170, 8
      %v814 = vld [vmem:[%s813] sm:$0xff]
      %v816 = vlaneseq
      %v817 = vshrl.u32 %v816, 7
      %v818 = vsub.s32 0, %v817
      %v819 = vrot.slane %v814, %v818
      %v820 = vlaneseq
      %v821 = vshrl.u32 %v820, 7
      %v822 = vsub.s32 4, %v821
      %v823 = vrot.slane %v814, %v822
      %v826 = vlaneseq
      %v827 = vshrl.u32 %v826, 7
      %v828 = vsub.s32 0, %v827
      %v829 = vrot.slane %v819, %v828
      %v830 = vlaneseq
      %v831 = vshrl.u32 %v830, 7
      %v832 = vsub.s32 0, %v831
      %v833 = vrot.slane %v823, %v832
      %v834 = vmul.f32 %v188, %v829
      %v835 = vmul.f32 %v188, %v833
      %v836 = vadd.f32 %v834, 0.0
      %v837 = vadd.f32 %v835, 0.0
      %v838 = vlaneseq
      %v839 = vshrl.u32 %v838, 7
      %v840 = vsub.s32 1, %v839
      %v841 = vrot.slane %v814, %v840
      %v842 = vlaneseq
      %v843 = vshrl.u32 %v842, 7
      %v844 = vsub.s32 5, %v843
      %v845 = vrot.slane %v814, %v844
      %v848 = vlaneseq
      %v849 = vshrl.u32 %v848, 7
      %v850 = vsub.s32 1, %v849
      %v851 = vrot.slane %v841, %v850
      %v852 = vlaneseq
      %v853 = vshrl.u32 %v852, 7
      %v854 = vsub.s32 1, %v853
      %v855 = vrot.slane %v845, %v854
      %v856 = vmul.f32 %v215, %v851
      %v857 = vmul.f32 %v215, %v855
      %v858 = vadd.f32 %v836, %v856
      %v859 = vadd.f32 %v837, %v857
      %v860 = vlaneseq
      %v861 = vshrl.u32 %v860, 7
      %v862 = vsub.s32 2, %v861
      %v863 = vrot.slane %v814, %v862
      %v864 = vlaneseq
      %v865 = vshrl.u32 %v864, 7
      %v866 = vsub.s32 6, %v865
      %v867 = vrot.slane %v814, %v866
      %v870 = vlaneseq
      %v871 = vshrl.u32 %v870, 7
      %v872 = vsub.s32 2, %v871
      %v873 = vrot.slane %v863, %v872
      %v874 = vlaneseq
      %v875 = vshrl.u32 %v874, 7
      %v876 = vsub.s32 2, %v875
      %v877 = vrot.slane %v867, %v876
      %v878 = vmul.f32 %v241, %v873
      %v879 = vmul.f32 %v241, %v877
      %v880 = vadd.f32 %v858, %v878
      %v881 = vadd.f32 %v859, %v879
      %v882 = vlaneseq
      %v883 = vshrl.u32 %v882, 7
      %v884 = vsub.s32 3, %v883
      %v885 = vrot.slane %v814, %v884
      %v886 = vlaneseq
      %v887 = vshrl.u32 %v886, 7
      %v888 = vsub.s32 7, %v887
      %v889 = vrot.slane %v814, %v888
      %v892 = vlaneseq
      %v893 = vshrl.u32 %v892, 7
      %v894 = vsub.s32 3, %v893
      %v895 = vrot.slane %v885, %v894
      %v896 = vlaneseq
      %v897 = vshrl.u32 %v896, 7
      %v898 = vsub.s32 3, %v897
      %v899 = vrot.slane %v889, %v898
      %v900 = vmul.f32 %v267, %v895
      %v901 = vmul.f32 %v267, %v899
      %v902 = vadd.f32 %v880, %v900
      %v903 = vadd.f32 %v881, %v901
      %v904 = vadd.f32 %v902, %v293
      %v905 = vadd.f32 %v903, %v293
      %v906 = vxor.u32 %v904, 2147483648
      %v907 = vxor.u32 %v905, 2147483648
      %v908 = vmul.f32 %v906, 1.442695
      %v909 = vpow.pop %v908
      %v910 = vmul.f32 %v907, 1.442695
      %v911 = vpow.pop %v910
      %v912 = vadd.f32 %v909, 1.0
      %v913 = vadd.f32 %v911, 1.0
      %v914 = vrcp.pop %v912
      %v915 = vmul.f32 1.0, %v914
      %v916 = vrcp.pop %v913
      %v917 = vmul.f32 1.0, %v916
      %v918 = vmul.f32 %v904, %v915
      %v919 = vmul.f32 %v905, %v917
      %920 = vrot.lane.b32.xlu0 %v918, 17
      %v921 = vpop.permute.xlu0 %920
      %922 = vrot.lane.b32.xlu0 %v919, 17
      %v923 = vpop.permute.xlu0 %922
      %v924 = vsel %vm317, %v921, %v923
      %v925 = vsel %vm317, %v923, %v921
      %v926 = vmul.f32 %v925, %v323
      %v927 = vmul.f32 %v924, %v327
      %v928 = vmul.f32 %v926, %v332
      %v929 = vmul.f32 %v927, %v332
      %v930 = vadd.f32 %v928, 0.0
      %v931 = vadd.f32 %v929, 0.0
      %932 = vrot.lane.b32.xlu0 %v918, 16
      %v933 = vpop.permute.xlu0 %932
      %934 = vrot.lane.b32.xlu0 %v919, 16
      %v935 = vpop.permute.xlu0 %934
      %v936 = vsel %vm342, %v933, %v935
      %v937 = vsel %vm342, %v935, %v933
      %v938 = vmul.f32 %v937, %v348
      %v939 = vmul.f32 %v936, %v352
      %v940 = vmul.f32 %v938, %v357
      %v941 = vmul.f32 %v939, %v357
      %v942 = vadd.f32 %v930, %v940
      %v943 = vadd.f32 %v931, %v941
      %944 = vrot.lane.b32.xlu0 %v918, 15
      %v945 = vpop.permute.xlu0 %944
      %946 = vrot.lane.b32.xlu0 %v919, 15
      %v947 = vpop.permute.xlu0 %946
      %v948 = vsel %vm367, %v945, %v947
      %v949 = vsel %vm367, %v947, %v945
      %v950 = vmul.f32 %v949, %v373
      %v951 = vmul.f32 %v948, %v377
      %v952 = vmul.f32 %v950, %v382
      %v953 = vmul.f32 %v951, %v382
      %v954 = vadd.f32 %v942, %v952
      %v955 = vadd.f32 %v943, %v953
      %956 = vrot.lane.b32.xlu0 %v918, 1
      %v957 = vpop.permute.xlu0 %956
      %958 = vrot.lane.b32.xlu0 %v919, 1
      %v959 = vpop.permute.xlu0 %958
      %v960 = vsel %vm392, %v957, %v959
      %v961 = vsel %vm392, %v959, %v957
      %v962 = vmul.f32 %v961, %v398
      %v963 = vmul.f32 %v960, %v402
      %v964 = vmul.f32 %v962, %v407
      %v965 = vmul.f32 %v963, %v407
      %v966 = vadd.f32 %v954, %v964
      %v967 = vadd.f32 %v955, %v965
      %v968 = vmul.f32 %v918, %v415
      %v969 = vmul.f32 %v919, %v415
      %v970 = vadd.f32 %v966, %v968
      %v971 = vadd.f32 %v967, %v969
      %972 = vrot.lane.b32.xlu0 %v918, 127
      %v973 = vpop.permute.xlu0 %972
      %974 = vrot.lane.b32.xlu0 %v919, 127
      %v975 = vpop.permute.xlu0 %974
      %v976 = vsel %vm425, %v973, %v975
      %v977 = vsel %vm425, %v975, %v973
      %v978 = vmul.f32 %v976, %v431
      %v979 = vmul.f32 %v977, %v435
      %v980 = vmul.f32 %v978, %v440
      %v981 = vmul.f32 %v979, %v440
      %v982 = vadd.f32 %v970, %v980
      %v983 = vadd.f32 %v971, %v981
      %984 = vrot.lane.b32.xlu0 %v918, 113
      %v985 = vpop.permute.xlu0 %984
      %986 = vrot.lane.b32.xlu0 %v919, 113
      %v987 = vpop.permute.xlu0 %986
      %v988 = vsel %vm450, %v985, %v987
      %v989 = vsel %vm450, %v987, %v985
      %v990 = vmul.f32 %v988, %v456
      %v991 = vmul.f32 %v989, %v460
      %v992 = vmul.f32 %v990, %v465
      %v993 = vmul.f32 %v991, %v465
      %v994 = vadd.f32 %v982, %v992
      %v995 = vadd.f32 %v983, %v993
      %996 = vrot.lane.b32.xlu0 %v918, 112
      %v997 = vpop.permute.xlu0 %996
      %998 = vrot.lane.b32.xlu0 %v919, 112
      %v999 = vpop.permute.xlu0 %998
      %v1000 = vsel %vm475, %v997, %v999
      %v1001 = vsel %vm475, %v999, %v997
      %v1002 = vmul.f32 %v1000, %v481
      %v1003 = vmul.f32 %v1001, %v485
      %v1004 = vmul.f32 %v1002, %v490
      %v1005 = vmul.f32 %v1003, %v490
      %v1006 = vadd.f32 %v994, %v1004
      %v1007 = vadd.f32 %v995, %v1005
      %1008 = vrot.lane.b32.xlu0 %v918, 111
      %v1009 = vpop.permute.xlu0 %1008
      %1010 = vrot.lane.b32.xlu0 %v919, 111
      %v1011 = vpop.permute.xlu0 %1010
      %v1012 = vsel %vm500, %v1009, %v1011
      %v1013 = vsel %vm500, %v1011, %v1009
      %v1014 = vmul.f32 %v1012, %v506
      %v1015 = vmul.f32 %v1013, %v510
      %v1016 = vmul.f32 %v1014, %v515
      %v1017 = vmul.f32 %v1015, %v515
      %v1018 = vadd.f32 %v1006, %v1016
      %v1019 = vadd.f32 %v1007, %v1017
      %v1020 = vadd.f32 %v1018, %v523
      %v1021 = vadd.f32 %v1019, %v523
      %v1022 = vxor.u32 %v1020, 2147483648
      %v1023 = vxor.u32 %v1021, 2147483648
      %v1024 = vmul.f32 %v1022, 1.442695
      %v1025 = vpow.pop %v1024
      %v1026 = vmul.f32 %v1023, 1.442695
      %v1027 = vpow.pop %v1026
      %v1028 = vadd.f32 %v1025, 1.0
      %v1029 = vadd.f32 %v1027, 1.0
      %v1030 = vrcp.pop %v1028
      %v1031 = vmul.f32 1.0, %v1030
      %v1032 = vrcp.pop %v1029
      %v1033 = vmul.f32 1.0, %v1032
      %v1034 = vmul.f32 %v1020, %v1031
      %v1035 = vmul.f32 %v1021, %v1033
      %v1036 = vadd.f32 %v1034, %v1035
      %1037 = vadd.xlane.f32.xlu0 %v1036
      %v1038 = vpop.xlane.xlu0 %1037
      %v1039 = vmul.f32 %v1038, %v544
      %v1040 = vmul.f32 %v179, %v1039
      %v1041 = vsel %vm547, %v1040, 0.0
      %v1042 = vrot.slane %v1041, 4
      %v1043 = vadd.f32 %v1041, %v1042
      %v1044 = vrot.slane %v1043, 2
      %v1045 = vadd.f32 %v1043, %v1044
      %v1046 = vrot.slane %v1045, 1
      %v1047 = vadd.f32 %v1045, %v1046
      %v1048 = vadd.f32 %v1047, %v556
      %v1049 = vxor.u32 %v1048, 2147483648
      %v1050 = vmul.f32 %v1049, 1.442695
      %v1051 = vpow.pop %v1050
      %v1052 = vadd.f32 %v1051, 1.0
      %v1053 = vrcp.pop %v1052
      %v1054 = vmul.f32 1.0, %v1053
      %v1055 = vmul.f32 %v1048, %v1054
      %v1056 = vlaneseq
      %v1057 = vshrl.u32 %v1056, 7
      %v1058 = vsub.s32 0, %v1057
      %v1059 = vrot.slane %v1055, %v1058
      %1061 = vrot.lane.b32.xlu0 %v1059, 4
      %v1062 = vpop.permute.xlu0 %1061
      %v1064 = vmul.f32 %v179, %v1062
      %1066 = vrot.lane.b32.xlu0 %v1064, 109
      %v1067 = vpop.permute.xlu0 %1066
      %v1069 = vsel %vm579, %v1067, 0.0
      %1070 = vadd.xlane.f32.xlu0 %v1069
      %v1071 = vpop.xlane.xlu0 %1070
      %v1072 = vadd.f32 %v1071, %v179
      %v1073 = vxor.u32 %v1072, 2147483648
      %v1074 = vmul.f32 %v1073, 1.442695
      %v1075 = vpow.pop %v1074
      %v1076 = vadd.f32 %v1075, 1.0
      %v1077 = vrcp.pop %v1076
      %v1078 = vmul.f32 1.0, %v1077
      %v1079 = vlaneseq
      %v1080 = vshrl.u32 %v1079, 7
      %v1081 = vsub.s32 0, %v1080
      %v1082 = vrot.slane %v1078, %v1081
      %1084 = vrot.lane.b32.xlu0 %v1082, 1
      %v1085 = vpop.permute.xlu0 %1084
      %v1087 = vmul.f32 %v179, %v1085
      %1089 = vset.pattern.permute.xlu0 22
      %1090 = vperm.xlu0 %1089, %v1087
      %v1091 = vpop.permute.xlu0 %1090
      %v1093 = vlaneseq
      %v1094 = vshrl.u32 %v1093, 7
      %v1095 = vsub.s32 0, %v1094
      %v1096 = vrot.slane %v1034, %v1095
      %v1097 = vlaneseq
      %v1098 = vshrl.u32 %v1097, 7
      %v1099 = vsub.s32 0, %v1098
      %v1100 = vrot.slane %v1035, %v1099
      %v1101 = vmul.f32 %v1091, %v1096
      %v1102 = vmul.f32 %v1091, %v1100
      %v1103 = vadd.f32 %v1101, 0.0
      %v1104 = vadd.f32 %v1102, 0.0
      %v1105 = vlaneseq
      %v1106 = vshrl.u32 %v1105, 7
      %v1107 = vsub.s32 1, %v1106
      %v1108 = vrot.slane %v1078, %v1107
      %1110 = vrot.lane.b32.xlu0 %v1108, 2
      %v1111 = vpop.permute.xlu0 %1110
      %v1113 = vmul.f32 %v179, %v1111
      %1115 = vset.pattern.permute.xlu0 23
      %1116 = vperm.xlu0 %1115, %v1113
      %v1117 = vpop.permute.xlu0 %1116
      %v1119 = vlaneseq
      %v1120 = vshrl.u32 %v1119, 7
      %v1121 = vsub.s32 1, %v1120
      %v1122 = vrot.slane %v1034, %v1121
      %v1123 = vlaneseq
      %v1124 = vshrl.u32 %v1123, 7
      %v1125 = vsub.s32 1, %v1124
      %v1126 = vrot.slane %v1035, %v1125
      %v1127 = vmul.f32 %v1117, %v1122
      %v1128 = vmul.f32 %v1117, %v1126
      %v1129 = vadd.f32 %v1103, %v1127
      %v1130 = vadd.f32 %v1104, %v1128
      %v1131 = vlaneseq
      %v1132 = vshrl.u32 %v1131, 7
      %v1133 = vsub.s32 2, %v1132
      %v1134 = vrot.slane %v1078, %v1133
      %1136 = vrot.lane.b32.xlu0 %v1134, 3
      %v1137 = vpop.permute.xlu0 %1136
      %v1139 = vmul.f32 %v179, %v1137
      %1141 = vset.pattern.permute.xlu0 24
      %1142 = vperm.xlu0 %1141, %v1139
      %v1143 = vpop.permute.xlu0 %1142
      %v1145 = vlaneseq
      %v1146 = vshrl.u32 %v1145, 7
      %v1147 = vsub.s32 2, %v1146
      %v1148 = vrot.slane %v1034, %v1147
      %v1149 = vlaneseq
      %v1150 = vshrl.u32 %v1149, 7
      %v1151 = vsub.s32 2, %v1150
      %v1152 = vrot.slane %v1035, %v1151
      %v1153 = vmul.f32 %v1143, %v1148
      %v1154 = vmul.f32 %v1143, %v1152
      %v1155 = vadd.f32 %v1129, %v1153
      %v1156 = vadd.f32 %v1130, %v1154
      %v1157 = vlaneseq
      %v1158 = vshrl.u32 %v1157, 7
      %v1159 = vsub.s32 3, %v1158
      %v1160 = vrot.slane %v1078, %v1159
      %1162 = vrot.lane.b32.xlu0 %v1160, 4
      %v1163 = vpop.permute.xlu0 %1162
      %v1165 = vmul.f32 %v179, %v1163
      %1167 = vset.pattern.permute.xlu0 25
      %1168 = vperm.xlu0 %1167, %v1165
      %v1169 = vpop.permute.xlu0 %1168
      %v1171 = vlaneseq
      %v1172 = vshrl.u32 %v1171, 7
      %v1173 = vsub.s32 3, %v1172
      %v1174 = vrot.slane %v1034, %v1173
      %v1175 = vlaneseq
      %v1176 = vshrl.u32 %v1175, 7
      %v1177 = vsub.s32 3, %v1176
      %v1178 = vrot.slane %v1035, %v1177
      %v1179 = vmul.f32 %v1169, %v1174
      %v1180 = vmul.f32 %v1169, %v1178
      %v1181 = vadd.f32 %v1155, %v1179
      %v1182 = vadd.f32 %v1156, %v1180
      %v1183 = vlaneseq
      %v1184 = vshrl.u32 %v1183, 7
      %v1185 = vsub.s32 4, %v1184
      %v1186 = vrot.slane %v1078, %v1185
      %1188 = vrot.lane.b32.xlu0 %v1186, 5
      %v1189 = vpop.permute.xlu0 %1188
      %v1191 = vmul.f32 %v179, %v1189
      %1193 = vset.pattern.permute.xlu0 26
      %1194 = vperm.xlu0 %1193, %v1191
      %v1195 = vpop.permute.xlu0 %1194
      %v1197 = vlaneseq
      %v1198 = vshrl.u32 %v1197, 7
      %v1199 = vsub.s32 4, %v1198
      %v1200 = vrot.slane %v1034, %v1199
      %v1201 = vlaneseq
      %v1202 = vshrl.u32 %v1201, 7
      %v1203 = vsub.s32 4, %v1202
      %v1204 = vrot.slane %v1035, %v1203
      %v1205 = vmul.f32 %v1195, %v1200
      %v1206 = vmul.f32 %v1195, %v1204
      %v1207 = vadd.f32 %v1181, %v1205
      %v1208 = vadd.f32 %v1182, %v1206
      %v1209 = vlaneseq
      %v1210 = vshrl.u32 %v1209, 7
      %v1211 = vsub.s32 5, %v1210
      %v1212 = vrot.slane %v1078, %v1211
      %1214 = vrot.lane.b32.xlu0 %v1212, 6
      %v1215 = vpop.permute.xlu0 %1214
      %v1217 = vmul.f32 %v179, %v1215
      %1219 = vset.pattern.permute.xlu0 27
      %1220 = vperm.xlu0 %1219, %v1217
      %v1221 = vpop.permute.xlu0 %1220
      %v1223 = vlaneseq
      %v1224 = vshrl.u32 %v1223, 7
      %v1225 = vsub.s32 5, %v1224
      %v1226 = vrot.slane %v1034, %v1225
      %v1227 = vlaneseq
      %v1228 = vshrl.u32 %v1227, 7
      %v1229 = vsub.s32 5, %v1228
      %v1230 = vrot.slane %v1035, %v1229
      %v1231 = vmul.f32 %v1221, %v1226
      %v1232 = vmul.f32 %v1221, %v1230
      %v1233 = vadd.f32 %v1207, %v1231
      %v1234 = vadd.f32 %v1208, %v1232
      %v1235 = vlaneseq
      %v1236 = vshrl.u32 %v1235, 7
      %v1237 = vsub.s32 6, %v1236
      %v1238 = vrot.slane %v1078, %v1237
      %1240 = vrot.lane.b32.xlu0 %v1238, 7
      %v1241 = vpop.permute.xlu0 %1240
      %v1243 = vmul.f32 %v179, %v1241
      %1245 = vset.pattern.permute.xlu0 28
      %1246 = vperm.xlu0 %1245, %v1243
      %v1247 = vpop.permute.xlu0 %1246
      %v1249 = vlaneseq
      %v1250 = vshrl.u32 %v1249, 7
      %v1251 = vsub.s32 6, %v1250
      %v1252 = vrot.slane %v1034, %v1251
      %v1253 = vlaneseq
      %v1254 = vshrl.u32 %v1253, 7
      %v1255 = vsub.s32 6, %v1254
      %v1256 = vrot.slane %v1035, %v1255
      %v1257 = vmul.f32 %v1247, %v1252
      %v1258 = vmul.f32 %v1247, %v1256
      %v1259 = vadd.f32 %v1233, %v1257
      %v1260 = vadd.f32 %v1234, %v1258
      %v1261 = vlaneseq
      %v1262 = vshrl.u32 %v1261, 7
      %v1263 = vsub.s32 7, %v1262
      %v1264 = vrot.slane %v1078, %v1263
      %1266 = vrot.lane.b32.xlu0 %v1264, 8
      %v1267 = vpop.permute.xlu0 %1266
      %v1269 = vmul.f32 %v179, %v1267
      %1271 = vset.pattern.permute.xlu0 29
      %1272 = vperm.xlu0 %1271, %v1269
      %v1273 = vpop.permute.xlu0 %1272
      %v1275 = vlaneseq
      %v1276 = vshrl.u32 %v1275, 7
      %v1277 = vsub.s32 7, %v1276
      %v1278 = vrot.slane %v1034, %v1277
      %v1279 = vlaneseq
      %v1280 = vshrl.u32 %v1279, 7
      %v1281 = vsub.s32 7, %v1280
      %v1282 = vrot.slane %v1035, %v1281
      %v1283 = vmul.f32 %v1273, %v1278
      %v1284 = vmul.f32 %v1273, %v1282
      %v1285 = vadd.f32 %v1259, %v1283
      %v1286 = vadd.f32 %v1260, %v1284
      %v1287 = vadd.f32 %v1285, %v800
      %v1288 = vadd.f32 %v1286, %v800
      %v1289 = vcombine.high %v814, %v814
      %v1291 = vadd.f32 %v1287, %v814
      %v1292 = vadd.f32 %v1288, %v1289
      %v1295 = vcombine.low %v1291, %v1292
      %s1297 = scalar_lea.vmem %s177, 8
      %1298 = vst [vmem:[%s1297] sm:$0xff] %v1295
      %s1299 = smul.u32 2, %s14
      %p1300 = scmp.lt.s32.totalorder %s1299, 3
      %s1301 = scalar_select %p1300, %s1299, 3
      %s1302 = smul.addr %s1301, 2
      %s1303 = smul.addr %s1302, 4
      %s1304 = scalar_lea.vmem %s3, %s1303
      // Predicated region
      $region33: #{mbconv_forward.1} parent=31 // pred_check
        %p1305 = pneg %p100
      $region34: #{mbconv_forward.1} parent=31 // pred_check_branch
        %1307 = sbr.rel (%p1305) target = $region36
      $region35: #{mbconv_forward.1} parent=31 // pred_region
        %s1308 = smul.u32 2, %s14
      $region36: #{mbconv_forward.1} parent=31 // pred_fallthru
        _
    $region32: #{mbconv_forward.1} parent=5 // pred_fallthru
      _
    %p1309 = scmp.le.s32.totalorder 2, %s9
    // Predicated region
    $region37: #{mbconv_forward.1} parent=5 // pred_check
      %p1310 = pneg %p1309
    $region38: #{mbconv_forward.1} parent=5 // pred_check_branch
      %1312 = sbr.rel (%p1310) target = $region40
    $region39: #{mbconv_forward.1} parent=5 // pred_region
      %s1313 = ssub.s32 %s9, 2
      // Predicated region
      $region41: #{mbconv_forward.1} parent=39 // pred_check
        %p1314 = pneg %p106
      $region42: #{mbconv_forward.1} parent=39 // pred_check_branch
        %1316 = sbr.rel (%p1314) target = $region44
      $region43: #{mbconv_forward.1} parent=39 // pred_region
        %s1317 = smul.u32 2, %s15
        %p1318 = scmp.lt.s32.totalorder %s1317, 3
        %s1319 = scalar_select %p1318, %s1317, 3
        %s1320 = smul.addr %s1319, 2
        %s1321 = smul.addr %s1320, 4
        %s1322 = scalar_lea.vmem %s3, %s1321
      $region44: #{mbconv_forward.1} parent=39 // pred_fallthru
        _
    $region40: #{mbconv_forward.1} parent=5 // pred_fallthru
      _
  $region6: #{mbconv_forward.1} parent=0 // loop_footer
    %s13 = sadd.s32 1, %s9
  $region7: #{mbconv_forward.1} parent=0 // loop_footer_branch
    %8 = sbr.rel target = $region3
  $region8: #{mbconv_forward.1} parent=0 // loop_exit
    _

</llo_original>
